<compile_context>
chip_gen: v5e
topology: v5e:2x2
jax: 0.10.0
libtpu: 0.0.40
codegen_flags: <defaults>
</compile_context>

<pallas_src>
import functools

import jax
import jax.numpy as jnp
from jax import lax
from jax.experimental import pallas as pl
from jax.experimental.pallas import tpu as pltpu

_LANE = 128
_SUBLANE = 8


def _vmem_capacity_bytes():
    try:
        return int(pltpu.get_tpu_info().vmem_capacity_bytes)
    except Exception:
        return 64 * 1024 * 1024  # conservative fallback (v7x physical VMEM)


def _ceil_to(x, m):
    return -(-x // m) * m


def _load_tap(x_ref, r0, c0, th, wo, stride):
    """Load one (th, wo, Cin) conv tap from the padded NHWC image ref."""
    if stride == 1:
        return x_ref[0, pl.ds(r0, th), pl.ds(c0, wo), :]
    # stride > 1: load the contiguous span, stride-select at the value level.
    span_h = (th - 1) * stride + 1
    span_w = (wo - 1) * stride + 1
    full = x_ref[0, pl.ds(r0, span_h), pl.ds(c0, span_w), :]
    return full[::stride, ::stride, :]


def _conv_im2col_kernel(x_ref, w_ref, bn_ref, o_ref, col_ref,
                        *, stride, KH, KW, TH, WO, CIN):
    """Small-Cin path: im2col built once per (n, h) strip, reused for all Cout tiles.

    x_ref:   (1, Hp, Wp, Cin)      padded input image (resident per batch element)
    w_ref:   (KH*KW*Cin, TC)       packed conv weights (input dtype)
    bn_ref:  (2, TC)               f32 [scale; bias] (folded eval-mode BatchNorm)
    o_ref:   (1, TH*WO, TC)        lane-dense output slab block
    col_ref: (TH*WO, KH*KW*Cin)    im2col scratch (persists across grid steps)
    """
    h = pl.program_id(1)
    row0 = h * (TH * stride)

    # Build the patch matrix only for the first Cout tile of this (n, h) strip;
    # the Cout grid axis is "arbitrary", so col_ref is reused by the others.
    @pl.when(pl.program_id(2) == 0)
    def _build_col():
        for kh in range(KH):
            for kw in range(KW):
                t = kh * KW + kw
                tap = _load_tap(x_ref, row0 + kh, kw, TH, WO, stride)
                col_ref[:, t * CIN:(t + 1) * CIN] = tap.reshape(TH * WO, CIN)

    # One MXU matmul, K = KH*KW*Cin, f32 accumulation.
    acc = jnp.dot(col_ref[...], w_ref[...], preferred_element_type=jnp.float32)
    y = jnp.maximum(acc * bn_ref[0:1, :] + bn_ref[1:2, :], 0.0)
    o_ref[0] = y.astype(o_ref.dtype)


def _conv_pertap_kernel(x_ref, w_ref, bn_ref, o_ref, acc_ref,
                        *, stride, KH, KW, TH, WO, CIN):
    """Large-Cin path: no im2col; KH*KW matmuls with K = Cin accumulated in f32.

    w_ref:   (KH*KW, Cin, TC)
    acc_ref: (TH*WO, TC) f32 VMEM accumulator
    """
    h = pl.program_id(1)
    row0 = h * (TH * stride)
    for kh in range(KH):
        for kw in range(KW):
            t = kh * KW + kw
            tap = _load_tap(x_ref, row0 + kh, kw, TH, WO, stride)
            part = jnp.dot(tap.reshape(TH * WO, CIN), w_ref[t],
                           preferred_element_type=jnp.float32)
            if t == 0:
                acc_ref[...] = part
            else:
                acc_ref[...] += part
    y = jnp.maximum(acc_ref[...] * bn_ref[0:1, :] + bn_ref[1:2, :], 0.0)
    o_ref[0] = y.astype(o_ref.dtype)


def conv2d_bn_act(x_nchw, weight, gamma, beta, running_mean, running_var,
                  *, stride=1, eps=1e-5):
    """Fused Conv2d(bias=False, padding=(k-1)//2, 'zeros') + BatchNorm2d(eval) + ReLU.

    x_nchw: (N, Cin, H, W);  weight: (Cout, Cin, KH, KW)  ->  (N, Cout, Ho, Wo)
    """
    N, Cin, H, W = x_nchw.shape
    Cout, Cin_w, KH, KW = weight.shape
    assert Cin_w == Cin, "groups != 1 not supported"
    pad_h, pad_w = (KH - 1) // 2, (KW - 1) // 2

    dtype = x_nchw.dtype
    f32 = jnp.float32
    itemsize = jnp.dtype(dtype).itemsize

    # Eval-mode BatchNorm folded into a per-channel (scale, bias) f32 epilogue.
    scale = gamma.astype(f32) / jnp.sqrt(running_var.astype(f32) + eps)
    bias = beta.astype(f32) - running_mean.astype(f32) * scale

    Hp, Wp = H + 2 * pad_h, W + 2 * pad_w
    Ho = (Hp - KH) // stride + 1
    Wo = (Wp - KW) // stride + 1

    # Lane-pad Cout; TC = 256 fills the 256-wide MXU (v6e/v7x) when it divides.
    Cout_p = _ceil_to(Cout, _LANE)
    TC = 256 if Cout_p % 256 == 0 else _LANE
    NC = Cout_p // TC

    # Sublane-pad Wo so every in-kernel reshape stays within (8,128) tiles.
    Wo_p = _ceil_to(Wo, _SUBLANE)

    use_im2col = Cin < 128
    K_total = KH * KW * Cin

    # ---- row-strip height TH under an honest, generation-aware VMEM budget ----
    capacity = _vmem_capacity_bytes()
    budget = int(capacity * 0.70)

    def footprint(th):
        m = th * Wo_p
        ho_pad = _ceil_to(Ho, th)
        hp_pad = max((ho_pad - 1) * stride + KH, Hp)
        wp_pad = max((Wo_p - 1) * stride + KW, Wp)
        inp = 2 * hp_pad * wp_pad * Cin * itemsize      # double-buffered image block
        wgt = 2 * K_total * TC * itemsize               # double-buffered weight block
        out = 2 * m * TC * itemsize                     # double-buffered output block
        bn_b = 2 * 2 * TC * 4
        scr = m * (K_total * itemsize if use_im2col else TC * 4)
        return inp + wgt + out + bn_b + scr

    TH = max(1, min(Ho, -(-1024 // Wo_p)))              # aim ~1024 output rows / step
    while TH > 1 and footprint(TH) > budget:
        TH -= 1
    NH = -(-Ho // TH)
    TH = -(-Ho // NH)                                   # rebalance -> minimal ragged waste
    Ho_p = NH * TH
    M = TH * Wo_p

    # ---- wrapper-side layout: NCHW -> NHWC, zero padding (incl. ragged extras) ----
    Hp_in = max((Ho_p - 1) * stride + KH, Hp)
    Wp_in = max((Wo_p - 1) * stride + KW, Wp)
    x = jnp.transpose(x_nchw, (0, 2, 3, 1))
    x = jnp.pad(x, ((0, 0),
                    (pad_h, Hp_in - H - pad_h),
                    (pad_w, Wp_in - W - pad_w),
                    (0, 0)))

    # ---- weights / BN operands ----
    w = jnp.transpose(weight.astype(f32), (2, 3, 1, 0))        # (KH, KW, Cin, Cout)
    if Cout_p != Cout:
        w = jnp.pad(w, ((0, 0), (0, 0), (0, 0), (0, Cout_p - Cout)))
        scale = jnp.pad(scale, (0, Cout_p - Cout))
        bias = jnp.pad(bias, (0, Cout_p - Cout))
    bn = jnp.stack([scale, bias]).astype(f32)                  # (2, Cout_p)

    if use_im2col:
        w = w.reshape(K_total, Cout_p).astype(dtype)
        w_spec = pl.BlockSpec((K_total, TC), lambda n, h, c: (0, c))
        scratch = pltpu.VMEM((M, K_total), dtype)
        kern = functools.partial(_conv_im2col_kernel, stride=stride, KH=KH, KW=KW,
                                 TH=TH, WO=Wo_p, CIN=Cin)
        # Cout axis must be sequential so the im2col scratch is built once per (n, h);
        # the 2-TC (v7x) split comes from the N / row-strip axes.
        dims = ("parallel", "parallel", "arbitrary")
    else:
        w = w.reshape(KH * KW, Cin, Cout_p).astype(dtype)
        w_spec = pl.BlockSpec((KH * KW, Cin, TC), lambda n, h, c: (0, 0, c))
        scratch = pltpu.VMEM((M, TC), jnp.float32)
        kern = functools.partial(_conv_pertap_kernel, stride=stride, KH=KH, KW=KW,
                                 TH=TH, WO=Wo_p, CIN=Cin)
        dims = ("parallel", "parallel", "parallel")

    cost = pl.CostEstimate(
        flops=2 * N * Ho * Wo * Cout * KH * KW * Cin,
        transcendentals=0,
        bytes_accessed=int(x.size * itemsize + w.size * itemsize + bn.size * 4
                           + N * Ho_p * Wo_p * Cout_p * itemsize))

    out = pl.pallas_call(
        kern,
        out_shape=jax.ShapeDtypeStruct((N, Ho_p * Wo_p, Cout_p), dtype),
        grid_spec=pltpu.PrefetchScalarGridSpec(
            num_scalar_prefetch=0,
            grid=(N, NH, NC),
            in_specs=[
                pl.BlockSpec((1, Hp_in, Wp_in, Cin), lambda n, h, c: (n, 0, 0, 0)),
                w_spec,
                pl.BlockSpec((2, TC), lambda n, h, c: (0, c)),
            ],
            out_specs=pl.BlockSpec((1, M, TC), lambda n, h, c: (n, h, c)),
            scratch_shapes=[scratch],
        ),
        compiler_params=pltpu.CompilerParams(
            dimension_semantics=dims,
            vmem_limit_bytes=int(capacity * 0.85)),
        cost_estimate=cost,
    )(x, w, bn)

    # Drop the Ho/Wo/Cout padding, NHWC -> NCHW to match the PyTorch module.
    out = out.reshape(N, Ho_p, Wo_p, Cout_p)[:, :Ho, :Wo, :Cout]
    return jnp.transpose(out, (0, 3, 1, 2))


def _reference(x, weight, gamma, beta, mean, var, *, stride=1, eps=1e-5):
    pad_h, pad_w = (weight.shape[2] - 1) // 2, (weight.shape[3] - 1) // 2
    y = lax.conv_general_dilated(
        x.astype(jnp.float32), weight.astype(jnp.float32),
        window_strides=(stride, stride),
        padding=((pad_h, pad_h), (pad_w, pad_w)),
        dimension_numbers=("NCHW", "OIHW", "NCHW"),
        precision=lax.Precision.HIGHEST)
    s = (gamma / jnp.sqrt(var + eps)).reshape(1, -1, 1, 1)
    b = (beta - mean * gamma / jnp.sqrt(var + eps)).reshape(1, -1, 1, 1)
    return jnp.maximum(y * s + b, 0.0)


def _run_case(key, N, Cin, H, W, Cout, K, atol, rtol):
    ks = jax.random.split(key, 6)
    x = jax.random.normal(ks[0], (N, Cin, H, W), dtype=jnp.float32)
    weight = jax.random.normal(ks[1], (Cout, Cin, K, K), dtype=jnp.float32) * 0.1
    gamma = 1.0 + 0.1 * jax.random.normal(ks[2], (Cout,), dtype=jnp.float32)
    beta = 0.1 * jax.random.normal(ks[3], (Cout,), dtype=jnp.float32)
    mean = 0.1 * jax.random.normal(ks[4], (Cout,), dtype=jnp.float32)
    var = jnp.abs(jax.random.normal(ks[5], (Cout,), dtype=jnp.float32)) + 0.5

    out = jax.block_until_ready(conv2d_bn_act(x, weight, gamma, beta, mean, var))
    ref = _reference(x, weight, gamma, beta, mean, var)
    assert out.shape == ref.shape, (out.shape, ref.shape)
    assert jnp.allclose(out, ref, atol=atol, rtol=rtol), \
        f"mismatch vs reference: max abs err {jnp.max(jnp.abs(out - ref))}"


if __name__ == "__main__":
    root = jax.random.PRNGKey(0)
    k1, k2 = jax.random.split(root)
    # Small-Cin path (im2col built once per row strip, reused across Cout tiles).
    _run_case(k1, N=2, Cin=4, H=16, W=16, Cout=8, K=3, atol=1e-3, rtol=1e-3)
    # Large-Cin path (per-tap K=Cin accumulation, no im2col); looser tolerance sized
    # for default-precision MXU f32 matmul over the K = KH*KW*Cin contraction.
    _run_case(k2, N=1, Cin=128, H=8, W=8, Cout=128, K=3, atol=2e-2, rtol=2e-2)
    print("KERNEL_OK")
</pallas_src>

<mosaic_0001>
module attributes {stable_mosaic.version = 11 : i64} {
  func.func @_conv_im2col_kernel(%arg0: i32, %arg1: i32, %arg2: i32, %arg3: memref<1x18x18x4xf32, #tpu.memory_space<vmem>>, %arg4: memref<36x128xf32, #tpu.memory_space<vmem>>, %arg5: memref<2x128xf32, #tpu.memory_space<vmem>>, %arg6: memref<1x256x128xf32, #tpu.memory_space<vmem>>, %arg7: memref<256x36xf32, #tpu.memory_space<vmem>>) attributes {dimension_semantics = [#tpu.dimension_semantics<parallel>, #tpu.dimension_semantics<parallel>, #tpu.dimension_semantics<arbitrary>], iteration_bounds = array<i64: 2, 1, 1>, scalar_prefetch = 0 : i64, scratch_operands = 1 : i64, tpu.core_type = #tpu.core_type<tc>, window_params = [{transform_indices = @transform_0, window_bounds = array<i64: 1, 18, 18, 4>}, {transform_indices = @transform_1, window_bounds = array<i64: 36, 128>}, {transform_indices = @transform_2, window_bounds = array<i64: 2, 128>}, {transform_indices = @transform_3, window_bounds = array<i64: 1, 256, 128>}]} {
    %c16_i32 = arith.constant 16 : i32
    %0 = arith.muli %arg1, %c16_i32 : i32
    %c0_i32 = arith.constant 0 : i32
    %1 = arith.cmpi eq, %arg2, %c0_i32 : i32
    %2 = arith.extui %1 : i1 to i32
    %c0_i32_0 = arith.constant 0 : i32
    %3 = arith.cmpi ne, %2, %c0_i32_0 : i32
    scf.if %3 {
      %c0_i32_11 = arith.constant 0 : i32
      %18 = arith.addi %0, %c0_i32_11 : i32
      %c0_12 = arith.constant 0 : index
      %19 = arith.index_cast %18 : i32 to index
      %c0_13 = arith.constant 0 : index
      %c0_14 = arith.constant 0 : index
      %20 = vector.load %arg3[%c0_12, %19, %c0_13, %c0_14] : memref<1x18x18x4xf32, #tpu.memory_space<vmem>>, vector<1x16x16x4xf32>
      %21 = vector.shape_cast %20 : vector<1x16x16x4xf32> to vector<16x16x4xf32>
      %22 = vector.shape_cast %21 : vector<16x16x4xf32> to vector<256x4xf32>
      %c0_15 = arith.constant 0 : index
      %c0_16 = arith.constant 0 : index
      %23 = vector.load %arg7[%c0_15, %c0_16] : memref<256x36xf32, #tpu.memory_space<vmem>>, vector<256x4xf32>
      tpu.vector_store %arg7[%c0_15, %c0_16], %22 {strides = array<i32>} : memref<256x36xf32, #tpu.memory_space<vmem>>, vector<256x4xf32>,
      %c0_i32_17 = arith.constant 0 : i32
      %24 = arith.addi %0, %c0_i32_17 : i32
      %c0_18 = arith.constant 0 : index
      %25 = arith.index_cast %24 : i32 to index
      %c1_19 = arith.constant 1 : index
      %c0_20 = arith.constant 0 : index
      %26 = vector.load %arg3[%c0_18, %25, %c1_19, %c0_20] : memref<1x18x18x4xf32, #tpu.memory_space<vmem>>, vector<1x16x16x4xf32>
      %27 = vector.shape_cast %26 : vector<1x16x16x4xf32> to vector<16x16x4xf32>
      %28 = vector.shape_cast %27 : vector<16x16x4xf32> to vector<256x4xf32>
      %c0_21 = arith.constant 0 : index
      %c4 = arith.constant 4 : index
      %29 = vector.load %arg7[%c0_21, %c4] : memref<256x36xf32, #tpu.memory_space<vmem>>, vector<256x4xf32>
      tpu.vector_store %arg7[%c0_21, %c4], %28 {strides = array<i32>} : memref<256x36xf32, #tpu.memory_space<vmem>>, vector<256x4xf32>,
      %c0_i32_22 = arith.constant 0 : i32
      %30 = arith.addi %0, %c0_i32_22 : i32
      %c0_23 = arith.constant 0 : index
      %31 = arith.index_cast %30 : i32 to index
      %c2 = arith.constant 2 : index
      %c0_24 = arith.constant 0 : index
      %32 = vector.load %arg3[%c0_23, %31, %c2, %c0_24] : memref<1x18x18x4xf32, #tpu.memory_space<vmem>>, vector<1x16x16x4xf32>
      %33 = vector.shape_cast %32 : vector<1x16x16x4xf32> to vector<16x16x4xf32>
      %34 = vector.shape_cast %33 : vector<16x16x4xf32> to vector<256x4xf32>
      %c0_25 = arith.constant 0 : index
      %c8 = arith.constant 8 : index
      %35 = vector.load %arg7[%c0_25, %c8] : memref<256x36xf32, #tpu.memory_space<vmem>>, vector<256x4xf32>
      tpu.vector_store %arg7[%c0_25, %c8], %34 {strides = array<i32>} : memref<256x36xf32, #tpu.memory_space<vmem>>, vector<256x4xf32>,
      %c1_i32 = arith.constant 1 : i32
      %36 = arith.addi %0, %c1_i32 : i32
      %c0_26 = arith.constant 0 : index
      %37 = arith.index_cast %36 : i32 to index
      %c0_27 = arith.constant 0 : index
      %c0_28 = arith.constant 0 : index
      %38 = vector.load %arg3[%c0_26, %37, %c0_27, %c0_28] : memref<1x18x18x4xf32, #tpu.memory_space<vmem>>, vector<1x16x16x4xf32>
      %39 = vector.shape_cast %38 : vector<1x16x16x4xf32> to vector<16x16x4xf32>
      %40 = vector.shape_cast %39 : vector<16x16x4xf32> to vector<256x4xf32>
      %c0_29 = arith.constant 0 : index
      %c12 = arith.constant 12 : index
      %41 = vector.load %arg7[%c0_29, %c12] : memref<256x36xf32, #tpu.memory_space<vmem>>, vector<256x4xf32>
      tpu.vector_store %arg7[%c0_29, %c12], %40 {strides = array<i32>} : memref<256x36xf32, #tpu.memory_space<vmem>>, vector<256x4xf32>,
      %c1_i32_30 = arith.constant 1 : i32
      %42 = arith.addi %0, %c1_i32_30 : i32
      %c0_31 = arith.constant 0 : index
      %43 = arith.index_cast %42 : i32 to index
      %c1_32 = arith.constant 1 : index
      %c0_33 = arith.constant 0 : index
      %44 = vector.load %arg3[%c0_31, %43, %c1_32, %c0_33] : memref<1x18x18x4xf32, #tpu.memory_space<vmem>>, vector<1x16x16x4xf32>
      %45 = vector.shape_cast %44 : vector<1x16x16x4xf32> to vector<16x16x4xf32>
      %46 = vector.shape_cast %45 : vector<16x16x4xf32> to vector<256x4xf32>
      %c0_34 = arith.constant 0 : index
      %c16 = arith.constant 16 : index
      %47 = vector.load %arg7[%c0_34, %c16] : memref<256x36xf32, #tpu.memory_space<vmem>>, vector<256x4xf32>
      tpu.vector_store %arg7[%c0_34, %c16], %46 {strides = array<i32>} : memref<256x36xf32, #tpu.memory_space<vmem>>, vector<256x4xf32>,
      %c1_i32_35 = arith.constant 1 : i32
      %48 = arith.addi %0, %c1_i32_35 : i32
      %c0_36 = arith.constant 0 : index
      %49 = arith.index_cast %48 : i32 to index
      %c2_37 = arith.constant 2 : index
      %c0_38 = arith.constant 0 : index
      %50 = vector.load %arg3[%c0_36, %49, %c2_37, %c0_38] : memref<1x18x18x4xf32, #tpu.memory_space<vmem>>, vector<1x16x16x4xf32>
      %51 = vector.shape_cast %50 : vector<1x16x16x4xf32> to vector<16x16x4xf32>
      %52 = vector.shape_cast %51 : vector<16x16x4xf32> to vector<256x4xf32>
      %c0_39 = arith.constant 0 : index
      %c20 = arith.constant 20 : index
      %53 = vector.load %arg7[%c0_39, %c20] : memref<256x36xf32, #tpu.memory_space<vmem>>, vector<256x4xf32>
      tpu.vector_store %arg7[%c0_39, %c20], %52 {strides = array<i32>} : memref<256x36xf32, #tpu.memory_space<vmem>>, vector<256x4xf32>,
      %c2_i32 = arith.constant 2 : i32
      %54 = arith.addi %0, %c2_i32 : i32
      %c0_40 = arith.constant 0 : index
      %55 = arith.index_cast %54 : i32 to index
      %c0_41 = arith.constant 0 : index
      %c0_42 = arith.constant 0 : index
      %56 = vector.load %arg3[%c0_40, %55, %c0_41, %c0_42] : memref<1x18x18x4xf32, #tpu.memory_space<vmem>>, vector<1x16x16x4xf32>
      %57 = vector.shape_cast %56 : vector<1x16x16x4xf32> to vector<16x16x4xf32>
      %58 = vector.shape_cast %57 : vector<16x16x4xf32> to vector<256x4xf32>
      %c0_43 = arith.constant 0 : index
      %c24 = arith.constant 24 : index
      %59 = vector.load %arg7[%c0_43, %c24] : memref<256x36xf32, #tpu.memory_space<vmem>>, vector<256x4xf32>
      tpu.vector_store %arg7[%c0_43, %c24], %58 {strides = array<i32>} : memref<256x36xf32, #tpu.memory_space<vmem>>, vector<256x4xf32>,
      %c2_i32_44 = arith.constant 2 : i32
      %60 = arith.addi %0, %c2_i32_44 : i32
      %c0_45 = arith.constant 0 : index
      %61 = arith.index_cast %60 : i32 to index
      %c1_46 = arith.constant 1 : index
      %c0_47 = arith.constant 0 : index
      %62 = vector.load %arg3[%c0_45, %61, %c1_46, %c0_47] : memref<1x18x18x4xf32, #tpu.memory_space<vmem>>, vector<1x16x16x4xf32>
      %63 = vector.shape_cast %62 : vector<1x16x16x4xf32> to vector<16x16x4xf32>
      %64 = vector.shape_cast %63 : vector<16x16x4xf32> to vector<256x4xf32>
      %c0_48 = arith.constant 0 : index
      %c28 = arith.constant 28 : index
      %65 = vector.load %arg7[%c0_48, %c28] : memref<256x36xf32, #tpu.memory_space<vmem>>, vector<256x4xf32>
      tpu.vector_store %arg7[%c0_48, %c28], %64 {strides = array<i32>} : memref<256x36xf32, #tpu.memory_space<vmem>>, vector<256x4xf32>,
      %c2_i32_49 = arith.constant 2 : i32
      %66 = arith.addi %0, %c2_i32_49 : i32
      %c0_50 = arith.constant 0 : index
      %67 = arith.index_cast %66 : i32 to index
      %c2_51 = arith.constant 2 : index
      %c0_52 = arith.constant 0 : index
      %68 = vector.load %arg3[%c0_50, %67, %c2_51, %c0_52] : memref<1x18x18x4xf32, #tpu.memory_space<vmem>>, vector<1x16x16x4xf32>
      %69 = vector.shape_cast %68 : vector<1x16x16x4xf32> to vector<16x16x4xf32>
      %70 = vector.shape_cast %69 : vector<16x16x4xf32> to vector<256x4xf32>
      %c0_53 = arith.constant 0 : index
      %c32 = arith.constant 32 : index
      %71 = vector.load %arg7[%c0_53, %c32] : memref<256x36xf32, #tpu.memory_space<vmem>>, vector<256x4xf32>
      tpu.vector_store %arg7[%c0_53, %c32], %70 {strides = array<i32>} : memref<256x36xf32, #tpu.memory_space<vmem>>, vector<256x4xf32>,
    } else {
    }
    %c0 = arith.constant 0 : index
    %c0_1 = arith.constant 0 : index
    %4 = vector.load %arg7[%c0, %c0_1] : memref<256x36xf32, #tpu.memory_space<vmem>>, vector<256x36xf32>
    %c0_2 = arith.constant 0 : index
    %c0_3 = arith.constant 0 : index
    %5 = vector.load %arg4[%c0_2, %c0_3] : memref<36x128xf32, #tpu.memory_space<vmem>>, vector<36x128xf32>
    %cst = arith.constant dense<0.000000e+00> : vector<256x128xf32>
    %6 = tpu.matmul %4, %5, %cst {dimension_numbers = #tpu.dot_dimension_numbers<[1], [0], [0], [1], [0, 0, 1, 1], [], []>} : vector<256x36xf32>, vector<36x128xf32>, vector<256x128xf32> -> vector<256x128xf32>
    %c0_4 = arith.constant 0 : index
    %c0_5 = arith.constant 0 : index
    %7 = vector.load %arg5[%c0_4, %c0_5] : memref<2x128xf32, #tpu.memory_space<vmem>>, vector<1x128xf32>
    %8 = vector.broadcast %7 : vector<1x128xf32> to vector<256x128xf32>
    %9 = arith.mulf %6, %8 : vector<256x128xf32>
    %c1 = arith.constant 1 : index
    %c0_6 = arith.constant 0 : index
    %10 = vector.load %arg5[%c1, %c0_6] : memref<2x128xf32, #tpu.memory_space<vmem>>, vector<1x128xf32>
    %11 = vector.broadcast %10 : vector<1x128xf32> to vector<256x128xf32>
    %12 = arith.addf %9, %11 : vector<256x128xf32>
    %cst_7 = arith.constant 0.000000e+00 : f32
    %13 = vector.broadcast %cst_7 : f32 to vector<256x128xf32>
    %14 = arith.maximumf %12, %13 : vector<256x128xf32>
    %c0_8 = arith.constant 0 : index
    %c0_9 = arith.constant 0 : index
    %c0_10 = arith.constant 0 : index
    %15 = vector.load %arg6[%c0_8, %c0_9, %c0_10] : memref<1x256x128xf32, #tpu.memory_space<vmem>>, vector<1x256x128xf32>
    %16 = vector.shape_cast %15 : vector<1x256x128xf32> to vector<256x128xf32>
    %17 = vector.shape_cast %14 : vector<256x128xf32> to vector<1x256x128xf32>
    tpu.vector_store %arg6[%c0_8, %c0_9, %c0_10], %17 {strides = array<i32>} : memref<1x256x128xf32, #tpu.memory_space<vmem>>, vector<1x256x128xf32>,
    return
  }
  func.func @transform_0(%arg0: i32, %arg1: i32, %arg2: i32) -> (i32, i32, i32, i32) {
    %c0_i32 = arith.constant 0 : i32
    %c0_i32_0 = arith.constant 0 : i32
    %c0_i32_1 = arith.constant 0 : i32
    %c0_i32_2 = arith.constant 0 : i32
    return %arg0, %c0_i32, %c0_i32_0, %c0_i32_1 : i32, i32, i32, i32
  }
  func.func @transform_1(%arg0: i32, %arg1: i32, %arg2: i32) -> (i32, i32) {
    %c0_i32 = arith.constant 0 : i32
    %c0_i32_0 = arith.constant 0 : i32
    return %c0_i32, %arg2 : i32, i32
  }
  func.func @transform_2(%arg0: i32, %arg1: i32, %arg2: i32) -> (i32, i32) {
    %c0_i32 = arith.constant 0 : i32
    %c0_i32_0 = arith.constant 0 : i32
    return %c0_i32, %arg2 : i32, i32
  }
  func.func @transform_3(%arg0: i32, %arg1: i32, %arg2: i32) -> (i32, i32, i32) {
    %c0_i32 = arith.constant 0 : i32
    return %arg0, %arg1, %arg2 : i32, i32, i32
  }
}

</mosaic_0001>

<llo_original>
// kernel: tpu_custom_call.1
$region0: #{tpu_custom_call.1}
  #allocation0 [shape = 'u32[]', space=smem, size = 0x4, offset = 0x4, fixed_abs, tag = 'smem constant byte address 0x4 - core index']
  #allocation1 [shape = 'u32[72,128]{1,0:T(1,128)}', space=vmem, size = 0x9000, scoped, tag = 'internal scratch']
  #allocation2 [shape = 'f32[256,36]{1,0:T(8,128)}', space=vmem, size = 0x20000, scoped, tag = 'scratch operand']
  %s0 = inlined_call_operand.vmem [shape: f32[2,18,18,4], index: 0, kind: input, shape index: {}]
  %s1 = inlined_call_operand.vmem [shape: f32[36,128], index: 1, kind: input, shape index: {}]
  %s2 = inlined_call_operand.vmem [shape: f32[2,128], index: 2, kind: input, shape index: {}]
  %s3 = inlined_call_operand.hbm [shape: f32[2,256,128], index: 3, kind: output, shape index: {}]
  %s4 = sld [smem:[#allocation0]]
  $region49: #{tpu_custom_call.1} parent=0
    _
  %s6 = ssub.s32 1, %s4
  %s7 = scalar_select 0, %s6, %s4
  $region1: #{tpu_custom_call.1} parent=0
    #allocation3 [shape = 'u8[262144]{0}', space=vmem, size = 0x40000, scoped, tag = 'output window, operand 0']
    #allocation4 [shape = 's32[2]{0}', space=sflag, size = 0x8, scoped, tag = 'scoped memory for tpu_custom_call.1']
    %8 = vsyncpa [#allocation4], 0
    %s9 = scalar_lea.sflag [#allocation4], 1
    %10 = vsyncpa %s9, 0
    loop: start=0, step=1, limit=4
    $region2: #{tpu_custom_call.1} parent=1 // loop_pre_header
      _
    $region3: #{tpu_custom_call.1} parent=1 // loop_header
      %s12 = sphi 0, %s16
      %p13 = scmp.ge.s32.totalorder %s12, 4
      %s19 = sphi 0, %s38
      %s20 = sphi 0, %s34
      %s21 = sphi 0, %s30
      %s22 = sphi 0, %s19
      %s23 = sphi 0, %s20
      %s24 = sphi 0, %s21
      %s25 = sphi 0, %s22
      %s26 = sphi 0, %s23
      %s27 = sphi 0, %s24
      %s41 = sphi 0, %s43
      %s44 = sphi 0, %s41
      %s45 = sphi 0, %s44
      %s61 = sphi 0, %s45
      %s67 = sphi 0, %s69
      %s70 = sphi 0, %s67
      %s71 = sphi 0, %s70
      %s87 = sphi 0, %s71
      %s93 = sphi 0, %s95
      %s96 = sphi 0, %s93
      %s97 = sphi 0, %s96
      %s113 = sphi 0, %s97
      %s123 = sphi 0, %s125
      %s126 = sphi 0, %s123
      %s127 = sphi 0, %s126
      %s143 = sphi 0, %s127
    $region4: #{tpu_custom_call.1} parent=1 // loop_header_branch
      %15 = sbr.rel (%p13) target = $region8
    $region5: #{tpu_custom_call.1} parent=1 // loop_body
      %s17 = ssub.s32 %s12, 1
      %s18 = ssub.s32 %s12, 2
      %s28 = sadd.s32 1, %s21
      %p29 = scmp.ge.s32.totalorder %s28, 1
      %s30 = scalar_select %p29, 0, %s28
      %s31 = sadd.s32 1, %s20
      %s32 = scalar_select %p29, %s31, %s20
      %p33 = scmp.ge.s32.totalorder %s32, 1
      %s34 = scalar_select %p33, 0, %s32
      %s35 = sadd.s32 1, %s19
      %s36 = scalar_select %p33, %s35, %s19
      %p37 = scmp.ge.s32.totalorder %s36, 2
      %s38 = scalar_select %p37, 0, %s36
      %s39 = ssub.s32 %s19, %s38
      %p40 = scmp.eq.s32.totalorder %s39, 0
      %s42 = sadd.s32 %s41, 1
      %s43 = scalar_select %p40, %s41, %s42
      %p46 = pneg %p40
      %p47 = scmp.eq.s32.totalorder %s12, 1
      %p48 = por %p46, %p47
      %p49 = scmp.ne.s32.totalorder %s41, %s44
      %p50 = scmp.eq.s32.totalorder %s12, 0
      %p51 = por %p49, %p50
      %p52 = scmp.ne.s32.totalorder %s41, %s44
      %p53 = scmp.eq.s32.totalorder %s17, 1
      %p54 = por %p52, %p53
      %p55 = scmp.ne.s32.totalorder %s44, %s45
      %p56 = scmp.eq.s32.totalorder %s17, 0
      %p57 = por %p55, %p56
      %p58 = scmp.ne.s32.totalorder %s44, %s45
      %p59 = scmp.eq.s32.totalorder %s18, 1
      %p60 = por %p58, %p59
      %p62 = scmp.ne.s32.totalorder %s45, %s61
      %p63 = scmp.eq.s32.totalorder %s18, 0
      %p64 = por %p62, %p63
      %s65 = ssub.s32 %s21, %s30
      %p66 = scmp.eq.s32.totalorder %s65, 0
      %s68 = sadd.s32 %s67, 1
      %s69 = scalar_select %p66, %s67, %s68
      %p72 = pneg %p66
      %p73 = scmp.eq.s32.totalorder %s12, 1
      %p74 = por %p72, %p73
      %p75 = scmp.ne.s32.totalorder %s67, %s70
      %p76 = scmp.eq.s32.totalorder %s12, 0
      %p77 = por %p75, %p76
      %p78 = scmp.ne.s32.totalorder %s67, %s70
      %p79 = scmp.eq.s32.totalorder %s17, 1
      %p80 = por %p78, %p79
      %p81 = scmp.ne.s32.totalorder %s70, %s71
      %p82 = scmp.eq.s32.totalorder %s17, 0
      %p83 = por %p81, %p82
      %p84 = scmp.ne.s32.totalorder %s70, %s71
      %p85 = scmp.eq.s32.totalorder %s18, 1
      %p86 = por %p84, %p85
      %p88 = scmp.ne.s32.totalorder %s71, %s87
      %p89 = scmp.eq.s32.totalorder %s18, 0
      %p90 = por %p88, %p89
      %s91 = ssub.s32 %s21, %s30
      %p92 = scmp.eq.s32.totalorder %s91, 0
      %s94 = sadd.s32 %s93, 1
      %s95 = scalar_select %p92, %s93, %s94
      %p98 = pneg %p92
      %p99 = scmp.eq.s32.totalorder %s12, 1
      %p100 = por %p98, %p99
      %p101 = scmp.ne.s32.totalorder %s93, %s96
      %p102 = scmp.eq.s32.totalorder %s12, 0
      %p103 = por %p101, %p102
      %p104 = scmp.ne.s32.totalorder %s93, %s96
      %p105 = scmp.eq.s32.totalorder %s17, 1
      %p106 = por %p104, %p105
      %p107 = scmp.ne.s32.totalorder %s96, %s97
      %p108 = scmp.eq.s32.totalorder %s17, 0
      %p109 = por %p107, %p108
      %p110 = scmp.ne.s32.totalorder %s96, %s97
      %p111 = scmp.eq.s32.totalorder %s18, 1
      %p112 = por %p110, %p111
      %p114 = scmp.ne.s32.totalorder %s97, %s113
      %p115 = scmp.eq.s32.totalorder %s18, 0
      %p116 = por %p114, %p115
      %s117 = ssub.s32 %s19, %s38
      %s118 = ssub.s32 %s20, %s34
      %s119 = sor.u32 %s117, %s118
      %s120 = ssub.s32 %s21, %s30
      %s121 = sor.u32 %s119, %s120
      %p122 = scmp.eq.s32.totalorder %s121, 0
      %s124 = sadd.s32 %s123, 1
      %s125 = scalar_select %p122, %s123, %s124
      %p128 = pneg %p122
      %p129 = scmp.eq.s32.totalorder %s12, 1
      %p130 = por %p128, %p129
      %p131 = scmp.ne.s32.totalorder %s123, %s126
      %p132 = scmp.eq.s32.totalorder %s12, 0
      %p133 = por %p131, %p132
      %p134 = scmp.ne.s32.totalorder %s123, %s126
      %p135 = scmp.eq.s32.totalorder %s17, 1
      %p136 = por %p134, %p135
      %p137 = scmp.ne.s32.totalorder %s126, %s127
      %p138 = scmp.eq.s32.totalorder %s17, 0
      %p139 = por %p137, %p138
      %p140 = scmp.ne.s32.totalorder %s126, %s127
      %p141 = scmp.eq.s32.totalorder %s18, 1
      %p142 = por %p140, %p141
      %p144 = scmp.ne.s32.totalorder %s127, %s143
      %p145 = scmp.eq.s32.totalorder %s18, 0
      %p146 = por %p144, %p145
      %p147 = scmp.le.s32.totalorder 1, %s12
      %p148 = scmp.lt.s32.totalorder %s12, 3
      %p149 = pnand %p147, %p148
      %p150 = pneg %p149
      // Predicated region
      $region9: #{tpu_custom_call.1} parent=5 // pred_check
        _
      $region10: #{tpu_custom_call.1} parent=5 // pred_check_branch
        %152 = sbr.rel (%p149) target = $region12
      $region11: #{tpu_custom_call.1} parent=5 // pred_region
        %s153 = ssub.s32 %s12, 1
        // Predicated region
        $region13: #{tpu_custom_call.1} parent=11 // pred_check
          %p154 = pneg %p83
        $region14: #{tpu_custom_call.1} parent=11 // pred_check_branch
          %156 = sbr.rel (%p154) target = $region16
        $region15: #{tpu_custom_call.1} parent=11 // pred_region
          %p157 = scmp.lt.s32.totalorder %s24, 0
          %s158 = scalar_select %p157, %s24, 0
          %s159 = smul.addr %s158, 8
          %s160 = scalar_lea.vmem %s1, %s159
        $region16: #{tpu_custom_call.1} parent=11 // pred_fallthru
          _
        // Predicated region
        $region17: #{tpu_custom_call.1} parent=11 // pred_check
          %p161 = pneg %p109
        $region18: #{tpu_custom_call.1} parent=11 // pred_check_branch
          %163 = sbr.rel (%p161) target = $region20
        $region19: #{tpu_custom_call.1} parent=11 // pred_region
          %p164 = scmp.lt.s32.totalorder %s24, 0
          %s165 = scalar_select %p164, %s24, 0
          %s166 = smul.addr %s165, 2
          %s167 = scalar_lea.vmem %s2, %s166
        $region20: #{tpu_custom_call.1} parent=11 // pred_fallthru
          _
      $region12: #{tpu_custom_call.1} parent=5 // pred_fallthru
        _
      %p168 = scmp.lt.s32.totalorder %s12, 2
      // Predicated region
      $region21: #{tpu_custom_call.1} parent=5 // pred_check
        %p169 = pneg %p168
      $region22: #{tpu_custom_call.1} parent=5 // pred_check_branch
        %171 = sbr.rel (%p169) target = $region24
      $region23: #{tpu_custom_call.1} parent=5 // pred_region
        // Predicated region
        $region25: #{tpu_custom_call.1} parent=23 // pred_check
          %p172 = pneg %p51
        $region26: #{tpu_custom_call.1} parent=23 // pred_check_branch
          %174 = sbr.rel (%p172) target = $region28
        $region27: #{tpu_custom_call.1} parent=23 // pred_region
          %p175 = scmp.lt.s32.totalorder %s19, 1
          %s176 = scalar_select %p175, %s19, 1
          %s177 = smul.addr %s176, 54
          %s178 = smul.addr %s177, 8
          %s179 = scalar_lea.vmem %s0, %s178
        $region28: #{tpu_custom_call.1} parent=23 // pred_fallthru
          _
      $region24: #{tpu_custom_call.1} parent=5 // pred_fallthru
        _
      %p180 = scmp.le.s32.totalorder 1, %s12
      %p181 = scmp.lt.s32.totalorder %s12, 3
      %p182 = pnand %p180, %p181
      %p183 = pneg %p182
      // Predicated region
      $region29: #{tpu_custom_call.1} parent=5 // pred_check
        _
      $region30: #{tpu_custom_call.1} parent=5 // pred_check_branch
        %185 = sbr.rel (%p182) target = $region32
      $region31: #{tpu_custom_call.1} parent=5 // pred_region
        %s186 = ssub.s32 %s12, 1
        %p187 = scmp.lt.s32.totalorder %s22, 1
        %s188 = scalar_select %p187, %s22, 1
        %s189 = smul.addr %s188, 54
        %s190 = smul.addr %s189, 8
        %s191 = scalar_lea.vmem %s0, %s190
        %p192 = pneg %p57
        %p193 = pneg %p54
        %p194 = scmp.lt.s32.totalorder %s24, 0
        %s195 = scalar_select %p194, %s24, 0
        %s196 = smul.addr %s195, 8
        %s197 = scalar_lea.vmem %s1, %s196
        %p198 = pneg %p83
        %p199 = pneg %p80
        %p200 = scmp.lt.s32.totalorder %s24, 0
        %s201 = scalar_select %p200, %s24, 0
        %s202 = smul.addr %s201, 2
        %s203 = scalar_lea.vmem %s2, %s202
        %p204 = pneg %p109
        %p205 = pneg %p106
        %p206 = pneg %p139
        %p207 = pneg %p136
        %s208 = sand.u32 %s126, 1
        %s209 = scalar_lea.sflag [#allocation4], %s208
        %s210 = sand.u32 %s126, 1
        %s211 = smul.addr %s210, 256
        %s212 = scalar_lea.vmem [#allocation3], %s211
        %p213 = scmp.lt.s32.totalorder %s22, 1
        %s214 = scalar_select %p213, %s22, 1
        %s215 = smul.addr %s214, 54
        %s216 = smul.addr %s215, 8
        %s217 = scalar_lea.vmem %s0, %s216
        %p218 = scmp.lt.s32.totalorder %s24, 0
        %s219 = scalar_select %p218, %s24, 0
        %s220 = smul.addr %s219, 8
        %s221 = scalar_lea.vmem %s1, %s220
        %p222 = scmp.lt.s32.totalorder %s24, 0
        %s223 = scalar_select %p222, %s24, 0
        %s224 = smul.addr %s223, 2
        %s225 = scalar_lea.vmem %s2, %s224
        %s226 = smul.u32 32, %s23
        %s227 = smul.u32 %s23, 16
        %p228 = scmp.eq.s32.totalorder %s24, 0
        // Predicated region
        $region33: #{tpu_custom_call.1} parent=31 // pred_check
          %p229 = pneg %p228
        $region34: #{tpu_custom_call.1} parent=31 // pred_check_branch
          %231 = sbr.rel (%p229) target = $region36
        $region35: #{tpu_custom_call.1} parent=31 // pred_region
          %s232 = smul.u32 %s227, 24
          %s233 = scalar_lea.vmem %s217, %s232
          %v234 = vld [vmem:[%s233] sm:$0xff]
          %v235 = vld [vmem:[%s233 + $0x8] sm:$0xff]
          %v236 = vld [vmem:[%s233 + $0x18] sm:$0xff]
          %v237 = vld [vmem:[%s233 + $0x20] sm:$0xff]
          %v238 = vld [vmem:[%s233 + $0x30] sm:$0xff]
          %v239 = vld [vmem:[%s233 + $0x38] sm:$0xff]
          %v240 = vld [vmem:[%s233 + $0x48] sm:$0xff]
          %v241 = vld [vmem:[%s233 + $0x50] sm:$0xff]
          %v242 = vld [vmem:[%s233 + $0x60] sm:$0xff]
          %v243 = vld [vmem:[%s233 + $0x68] sm:$0xff]
          %v244 = vld [vmem:[%s233 + $0x78] sm:$0xff]
          %v245 = vld [vmem:[%s233 + $0x80] sm:$0xff]
          %v246 = vld [vmem:[%s233 + $0x90] sm:$0xff]
          %v247 = vld [vmem:[%s233 + $0x98] sm:$0xff]
          %v248 = vld [vmem:[%s233 + $0xa8] sm:$0xff]
          %v249 = vld [vmem:[%s233 + $0xb0] sm:$0xff]
          %v250 = vld [vmem:[%s233 + $0xc0] sm:$0xff]
          %v251 = vld [vmem:[%s233 + $0xc8] sm:$0xff]
          %v252 = vld [vmem:[%s233 + $0xd8] sm:$0xff]
          %v253 = vld [vmem:[%s233 + $0xe0] sm:$0xff]
          %v254 = vld [vmem:[%s233 + $0xf0] sm:$0xff]
          %v255 = vld [vmem:[%s233 + $0xf8] sm:$0xff]
          %v256 = vld [vmem:[%s233 + $0x108] sm:$0xff]
          %v257 = vld [vmem:[%s233 + $0x110] sm:$0xff]
          %v258 = vld [vmem:[%s233 + $0x120] sm:$0xff]
          %v259 = vld [vmem:[%s233 + $0x128] sm:$0xff]
          %v260 = vld [vmem:[%s233 + $0x138] sm:$0xff]
          %v261 = vld [vmem:[%s233 + $0x140] sm:$0xff]
          %v262 = vld [vmem:[%s233 + $0x150] sm:$0xff]
          %v263 = vld [vmem:[%s233 + $0x158] sm:$0xff]
          %v264 = vld [vmem:[%s233 + $0x168] sm:$0xff]
          %v265 = vld [vmem:[%s233 + $0x170] sm:$0xff]
          %vm266 = vcmask 31744
          %267 = vst.msk [vmem:[#allocation2] sm:$0xff] %vm266, %v234
          %268 = vst.msk [vmem:[#allocation2 + $0x8] sm:$0xff] %vm266, %v235
          %269 = vst.msk [vmem:[#allocation2 + $0x10] sm:$0xff] %vm266, %v236
          %270 = vst.msk [vmem:[#allocation2 + $0x18] sm:$0xff] %vm266, %v237
          %271 = vst.msk [vmem:[#allocation2 + $0x20] sm:$0xff] %vm266, %v238
          %272 = vst.msk [vmem:[#allocation2 + $0x28] sm:$0xff] %vm266, %v239
          %273 = vst.msk [vmem:[#allocation2 + $0x30] sm:$0xff] %vm266, %v240
          %274 = vst.msk [vmem:[#allocation2 + $0x38] sm:$0xff] %vm266, %v241
          %275 = vst.msk [vmem:[#allocation2 + $0x40] sm:$0xff] %vm266, %v242
          %276 = vst.msk [vmem:[#allocation2 + $0x48] sm:$0xff] %vm266, %v243
          %277 = vst.msk [vmem:[#allocation2 + $0x50] sm:$0xff] %vm266, %v244
          %278 = vst.msk [vmem:[#allocation2 + $0x58] sm:$0xff] %vm266, %v245
          %279 = vst.msk [vmem:[#allocation2 + $0x60] sm:$0xff] %vm266, %v246
          %280 = vst.msk [vmem:[#allocation2 + $0x68] sm:$0xff] %vm266, %v247
          %281 = vst.msk [vmem:[#allocation2 + $0x70] sm:$0xff] %vm266, %v248
          %282 = vst.msk [vmem:[#allocation2 + $0x78] sm:$0xff] %vm266, %v249
          %283 = vst.msk [vmem:[#allocation2 + $0x80] sm:$0xff] %vm266, %v250
          %284 = vst.msk [vmem:[#allocation2 + $0x88] sm:$0xff] %vm266, %v251
          %285 = vst.msk [vmem:[#allocation2 + $0x90] sm:$0xff] %vm266, %v252
          %286 = vst.msk [vmem:[#allocation2 + $0x98] sm:$0xff] %vm266, %v253
          %287 = vst.msk [vmem:[#allocation2 + $0xa0] sm:$0xff] %vm266, %v254
          %288 = vst.msk [vmem:[#allocation2 + $0xa8] sm:$0xff] %vm266, %v255
          %289 = vst.msk [vmem:[#allocation2 + $0xb0] sm:$0xff] %vm266, %v256
          %290 = vst.msk [vmem:[#allocation2 + $0xb8] sm:$0xff] %vm266, %v257
          %291 = vst.msk [vmem:[#allocation2 + $0xc0] sm:$0xff] %vm266, %v258
          %292 = vst.msk [vmem:[#allocation2 + $0xc8] sm:$0xff] %vm266, %v259
          %293 = vst.msk [vmem:[#allocation2 + $0xd0] sm:$0xff] %vm266, %v260
          %294 = vst.msk [vmem:[#allocation2 + $0xd8] sm:$0xff] %vm266, %v261
          %295 = vst.msk [vmem:[#allocation2 + $0xe0] sm:$0xff] %vm266, %v262
          %296 = vst.msk [vmem:[#allocation2 + $0xe8] sm:$0xff] %vm266, %v263
          %297 = vst.msk [vmem:[#allocation2 + $0xf0] sm:$0xff] %vm266, %v264
          %298 = vst.msk [vmem:[#allocation2 + $0xf8] sm:$0xff] %vm266, %v265
          %v299 = vld [vmem:[%s233 + $0x1] sm:$0xff]
          %v300 = vld [vmem:[%s233 + $0x9] sm:$0xff]
          %v301 = vld [vmem:[%s233 + $0x19] sm:$0xff]
          %v302 = vld [vmem:[%s233 + $0x21] sm:$0xff]
          %v303 = vld [vmem:[%s233 + $0x31] sm:$0xff]
          %v304 = vld [vmem:[%s233 + $0x39] sm:$0xff]
          %v305 = vld [vmem:[%s233 + $0x49] sm:$0xff]
          %v306 = vld [vmem:[%s233 + $0x51] sm:$0xff]
          %v307 = vld [vmem:[%s233 + $0x61] sm:$0xff]
          %v308 = vld [vmem:[%s233 + $0x69] sm:$0xff]
          %v309 = vld [vmem:[%s233 + $0x79] sm:$0xff]
          %v310 = vld [vmem:[%s233 + $0x81] sm:$0xff]
          %v311 = vld [vmem:[%s233 + $0x91] sm:$0xff]
          %v312 = vld [vmem:[%s233 + $0x99] sm:$0xff]
          %v313 = vld [vmem:[%s233 + $0xa9] sm:$0xff]
          %v314 = vld [vmem:[%s233 + $0xb1] sm:$0xff]
          %v315 = vld [vmem:[%s233 + $0xc1] sm:$0xff]
          %v316 = vld [vmem:[%s233 + $0xc9] sm:$0xff]
          %v317 = vld [vmem:[%s233 + $0xd9] sm:$0xff]
          %v318 = vld [vmem:[%s233 + $0xe1] sm:$0xff]
          %v319 = vld [vmem:[%s233 + $0xf1] sm:$0xff]
          %v320 = vld [vmem:[%s233 + $0xf9] sm:$0xff]
          %v321 = vld [vmem:[%s233 + $0x109] sm:$0xff]
          %v322 = vld [vmem:[%s233 + $0x111] sm:$0xff]
          %v323 = vld [vmem:[%s233 + $0x121] sm:$0xff]
          %v324 = vld [vmem:[%s233 + $0x129] sm:$0xff]
          %v325 = vld [vmem:[%s233 + $0x139] sm:$0xff]
          %v326 = vld [vmem:[%s233 + $0x141] sm:$0xff]
          %v327 = vld [vmem:[%s233 + $0x151] sm:$0xff]
          %v328 = vld [vmem:[%s233 + $0x159] sm:$0xff]
          %v329 = vld [vmem:[%s233 + $0x169] sm:$0xff]
          %v330 = vld [vmem:[%s233 + $0x171] sm:$0xff]
          %363 = vrot.lane.b32.xlu0 %v299, 4
          %v364 = vpop.permute.xlu0 %363
          %365 = vrot.lane.b32.xlu0 %v300, 4
          %v366 = vpop.permute.xlu0 %365
          %367 = vrot.lane.b32.xlu0 %v301, 4
          %v368 = vpop.permute.xlu0 %367
          %369 = vrot.lane.b32.xlu0 %v302, 4
          %v370 = vpop.permute.xlu0 %369
          %371 = vrot.lane.b32.xlu0 %v303, 4
          %v372 = vpop.permute.xlu0 %371
          %373 = vrot.lane.b32.xlu0 %v304, 4
          %v374 = vpop.permute.xlu0 %373
          %375 = vrot.lane.b32.xlu0 %v305, 4
          %v376 = vpop.permute.xlu0 %375
          %377 = vrot.lane.b32.xlu0 %v306, 4
          %v378 = vpop.permute.xlu0 %377
          %379 = vrot.lane.b32.xlu0 %v307, 4
          %v380 = vpop.permute.xlu0 %379
          %381 = vrot.lane.b32.xlu0 %v308, 4
          %v382 = vpop.permute.xlu0 %381
          %383 = vrot.lane.b32.xlu0 %v309, 4
          %v384 = vpop.permute.xlu0 %383
          %385 = vrot.lane.b32.xlu0 %v310, 4
          %v386 = vpop.permute.xlu0 %385
          %387 = vrot.lane.b32.xlu0 %v311, 4
          %v388 = vpop.permute.xlu0 %387
          %389 = vrot.lane.b32.xlu0 %v312, 4
          %v390 = vpop.permute.xlu0 %389
          %391 = vrot.lane.b32.xlu0 %v313, 4
          %v392 = vpop.permute.xlu0 %391
          %393 = vrot.lane.b32.xlu0 %v314, 4
          %v394 = vpop.permute.xlu0 %393
          %395 = vrot.lane.b32.xlu0 %v315, 4
          %v396 = vpop.permute.xlu0 %395
          %397 = vrot.lane.b32.xlu0 %v316, 4
          %v398 = vpop.permute.xlu0 %397
          %399 = vrot.lane.b32.xlu0 %v317, 4
          %v400 = vpop.permute.xlu0 %399
          %401 = vrot.lane.b32.xlu0 %v318, 4
          %v402 = vpop.permute.xlu0 %401
          %403 = vrot.lane.b32.xlu0 %v319, 4
          %v404 = vpop.permute.xlu0 %403
          %405 = vrot.lane.b32.xlu0 %v320, 4
          %v406 = vpop.permute.xlu0 %405
          %407 = vrot.lane.b32.xlu0 %v321, 4
          %v408 = vpop.permute.xlu0 %407
          %409 = vrot.lane.b32.xlu0 %v322, 4
          %v410 = vpop.permute.xlu0 %409
          %411 = vrot.lane.b32.xlu0 %v323, 4
          %v412 = vpop.permute.xlu0 %411
          %413 = vrot.lane.b32.xlu0 %v324, 4
          %v414 = vpop.permute.xlu0 %413
          %415 = vrot.lane.b32.xlu0 %v325, 4
          %v416 = vpop.permute.xlu0 %415
          %417 = vrot.lane.b32.xlu0 %v326, 4
          %v418 = vpop.permute.xlu0 %417
          %419 = vrot.lane.b32.xlu0 %v327, 4
          %v420 = vpop.permute.xlu0 %419
          %421 = vrot.lane.b32.xlu0 %v328, 4
          %v422 = vpop.permute.xlu0 %421
          %423 = vrot.lane.b32.xlu0 %v329, 4
          %v424 = vpop.permute.xlu0 %423
          %425 = vrot.lane.b32.xlu0 %v330, 4
          %v426 = vpop.permute.xlu0 %425
          %vm459 = vcmask 64544
          %460 = vst.msk [vmem:[#allocation2] sm:$0xff] %vm459, %v364
          %461 = vst.msk [vmem:[#allocation2 + $0x8] sm:$0xff] %vm459, %v366
          %462 = vst.msk [vmem:[#allocation2 + $0x10] sm:$0xff] %vm459, %v368
          %463 = vst.msk [vmem:[#allocation2 + $0x18] sm:$0xff] %vm459, %v370
          %464 = vst.msk [vmem:[#allocation2 + $0x20] sm:$0xff] %vm459, %v372
          %465 = vst.msk [vmem:[#allocation2 + $0x28] sm:$0xff] %vm459, %v374
          %466 = vst.msk [vmem:[#allocation2 + $0x30] sm:$0xff] %vm459, %v376
          %467 = vst.msk [vmem:[#allocation2 + $0x38] sm:$0xff] %vm459, %v378
          %468 = vst.msk [vmem:[#allocation2 + $0x40] sm:$0xff] %vm459, %v380
          %469 = vst.msk [vmem:[#allocation2 + $0x48] sm:$0xff] %vm459, %v382
          %470 = vst.msk [vmem:[#allocation2 + $0x50] sm:$0xff] %vm459, %v384
          %471 = vst.msk [vmem:[#allocation2 + $0x58] sm:$0xff] %vm459, %v386
          %472 = vst.msk [vmem:[#allocation2 + $0x60] sm:$0xff] %vm459, %v388
          %473 = vst.msk [vmem:[#allocation2 + $0x68] sm:$0xff] %vm459, %v390
          %474 = vst.msk [vmem:[#allocation2 + $0x70] sm:$0xff] %vm459, %v392
          %475 = vst.msk [vmem:[#allocation2 + $0x78] sm:$0xff] %vm459, %v394
          %476 = vst.msk [vmem:[#allocation2 + $0x80] sm:$0xff] %vm459, %v396
          %477 = vst.msk [vmem:[#allocation2 + $0x88] sm:$0xff] %vm459, %v398
          %478 = vst.msk [vmem:[#allocation2 + $0x90] sm:$0xff] %vm459, %v400
          %479 = vst.msk [vmem:[#allocation2 + $0x98] sm:$0xff] %vm459, %v402
          %480 = vst.msk [vmem:[#allocation2 + $0xa0] sm:$0xff] %vm459, %v404
          %481 = vst.msk [vmem:[#allocation2 + $0xa8] sm:$0xff] %vm459, %v406
          %482 = vst.msk [vmem:[#allocation2 + $0xb0] sm:$0xff] %vm459, %v408
          %483 = vst.msk [vmem:[#allocation2 + $0xb8] sm:$0xff] %vm459, %v410
          %484 = vst.msk [vmem:[#allocation2 + $0xc0] sm:$0xff] %vm459, %v412
          %485 = vst.msk [vmem:[#allocation2 + $0xc8] sm:$0xff] %vm459, %v414
          %486 = vst.msk [vmem:[#allocation2 + $0xd0] sm:$0xff] %vm459, %v416
          %487 = vst.msk [vmem:[#allocation2 + $0xd8] sm:$0xff] %vm459, %v418
          %488 = vst.msk [vmem:[#allocation2 + $0xe0] sm:$0xff] %vm459, %v420
          %489 = vst.msk [vmem:[#allocation2 + $0xe8] sm:$0xff] %vm459, %v422
          %490 = vst.msk [vmem:[#allocation2 + $0xf0] sm:$0xff] %vm459, %v424
          %491 = vst.msk [vmem:[#allocation2 + $0xf8] sm:$0xff] %vm459, %v426
          %v492 = vld [vmem:[%s233 + $0x2] sm:$0xff]
          %v493 = vld [vmem:[%s233 + $0xa] sm:$0xff]
          %v494 = vld [vmem:[%s233 + $0x1a] sm:$0xff]
          %v495 = vld [vmem:[%s233 + $0x22] sm:$0xff]
          %v496 = vld [vmem:[%s233 + $0x32] sm:$0xff]
          %v497 = vld [vmem:[%s233 + $0x3a] sm:$0xff]
          %v498 = vld [vmem:[%s233 + $0x4a] sm:$0xff]
          %v499 = vld [vmem:[%s233 + $0x52] sm:$0xff]
          %v500 = vld [vmem:[%s233 + $0x62] sm:$0xff]
          %v501 = vld [vmem:[%s233 + $0x6a] sm:$0xff]
          %v502 = vld [vmem:[%s233 + $0x7a] sm:$0xff]
          %v503 = vld [vmem:[%s233 + $0x82] sm:$0xff]
          %v504 = vld [vmem:[%s233 + $0x92] sm:$0xff]
          %v505 = vld [vmem:[%s233 + $0x9a] sm:$0xff]
          %v506 = vld [vmem:[%s233 + $0xaa] sm:$0xff]
          %v507 = vld [vmem:[%s233 + $0xb2] sm:$0xff]
          %v508 = vld [vmem:[%s233 + $0xc2] sm:$0xff]
          %v509 = vld [vmem:[%s233 + $0xca] sm:$0xff]
          %v510 = vld [vmem:[%s233 + $0xda] sm:$0xff]
          %v511 = vld [vmem:[%s233 + $0xe2] sm:$0xff]
          %v512 = vld [vmem:[%s233 + $0xf2] sm:$0xff]
          %v513 = vld [vmem:[%s233 + $0xfa] sm:$0xff]
          %v514 = vld [vmem:[%s233 + $0x10a] sm:$0xff]
          %v515 = vld [vmem:[%s233 + $0x112] sm:$0xff]
          %v516 = vld [vmem:[%s233 + $0x122] sm:$0xff]
          %v517 = vld [vmem:[%s233 + $0x12a] sm:$0xff]
          %v518 = vld [vmem:[%s233 + $0x13a] sm:$0xff]
          %v519 = vld [vmem:[%s233 + $0x142] sm:$0xff]
          %v520 = vld [vmem:[%s233 + $0x152] sm:$0xff]
          %v521 = vld [vmem:[%s233 + $0x15a] sm:$0xff]
          %v522 = vld [vmem:[%s233 + $0x16a] sm:$0xff]
          %v523 = vld [vmem:[%s233 + $0x172] sm:$0xff]
          %556 = vrot.lane.b32.xlu0 %v492, 8
          %v557 = vpop.permute.xlu0 %556
          %558 = vrot.lane.b32.xlu0 %v493, 8
          %v559 = vpop.permute.xlu0 %558
          %560 = vrot.lane.b32.xlu0 %v494, 8
          %v561 = vpop.permute.xlu0 %560
          %562 = vrot.lane.b32.xlu0 %v495, 8
          %v563 = vpop.permute.xlu0 %562
          %564 = vrot.lane.b32.xlu0 %v496, 8
          %v565 = vpop.permute.xlu0 %564
          %566 = vrot.lane.b32.xlu0 %v497, 8
          %v567 = vpop.permute.xlu0 %566
          %568 = vrot.lane.b32.xlu0 %v498, 8
          %v569 = vpop.permute.xlu0 %568
          %570 = vrot.lane.b32.xlu0 %v499, 8
          %v571 = vpop.permute.xlu0 %570
          %572 = vrot.lane.b32.xlu0 %v500, 8
          %v573 = vpop.permute.xlu0 %572
          %574 = vrot.lane.b32.xlu0 %v501, 8
          %v575 = vpop.permute.xlu0 %574
          %576 = vrot.lane.b32.xlu0 %v502, 8
          %v577 = vpop.permute.xlu0 %576
          %578 = vrot.lane.b32.xlu0 %v503, 8
          %v579 = vpop.permute.xlu0 %578
          %580 = vrot.lane.b32.xlu0 %v504, 8
          %v581 = vpop.permute.xlu0 %580
          %582 = vrot.lane.b32.xlu0 %v505, 8
          %v583 = vpop.permute.xlu0 %582
          %584 = vrot.lane.b32.xlu0 %v506, 8
          %v585 = vpop.permute.xlu0 %584
          %586 = vrot.lane.b32.xlu0 %v507, 8
          %v587 = vpop.permute.xlu0 %586
          %588 = vrot.lane.b32.xlu0 %v508, 8
          %v589 = vpop.permute.xlu0 %588
          %590 = vrot.lane.b32.xlu0 %v509, 8
          %v591 = vpop.permute.xlu0 %590
          %592 = vrot.lane.b32.xlu0 %v510, 8
          %v593 = vpop.permute.xlu0 %592
          %594 = vrot.lane.b32.xlu0 %v511, 8
          %v595 = vpop.permute.xlu0 %594
          %596 = vrot.lane.b32.xlu0 %v512, 8
          %v597 = vpop.permute.xlu0 %596
          %598 = vrot.lane.b32.xlu0 %v513, 8
          %v599 = vpop.permute.xlu0 %598
          %600 = vrot.lane.b32.xlu0 %v514, 8
          %v601 = vpop.permute.xlu0 %600
          %602 = vrot.lane.b32.xlu0 %v515, 8
          %v603 = vpop.permute.xlu0 %602
          %604 = vrot.lane.b32.xlu0 %v516, 8
          %v605 = vpop.permute.xlu0 %604
          %606 = vrot.lane.b32.xlu0 %v517, 8
          %v607 = vpop.permute.xlu0 %606
          %608 = vrot.lane.b32.xlu0 %v518, 8
          %v609 = vpop.permute.xlu0 %608
          %610 = vrot.lane.b32.xlu0 %v519, 8
          %v611 = vpop.permute.xlu0 %610
          %612 = vrot.lane.b32.xlu0 %v520, 8
          %v613 = vpop.permute.xlu0 %612
          %614 = vrot.lane.b32.xlu0 %v521, 8
          %v615 = vpop.permute.xlu0 %614
          %616 = vrot.lane.b32.xlu0 %v522, 8
          %v617 = vpop.permute.xlu0 %616
          %618 = vrot.lane.b32.xlu0 %v523, 8
          %v619 = vpop.permute.xlu0 %618
          %vm652 = vcmask 97344
          %653 = vst.msk [vmem:[#allocation2] sm:$0xff] %vm652, %v557
          %654 = vst.msk [vmem:[#allocation2 + $0x8] sm:$0xff] %vm652, %v559
          %655 = vst.msk [vmem:[#allocation2 + $0x10] sm:$0xff] %vm652, %v561
          %656 = vst.msk [vmem:[#allocation2 + $0x18] sm:$0xff] %vm652, %v563
          %657 = vst.msk [vmem:[#allocation2 + $0x20] sm:$0xff] %vm652, %v565
          %658 = vst.msk [vmem:[#allocation2 + $0x28] sm:$0xff] %vm652, %v567
          %659 = vst.msk [vmem:[#allocation2 + $0x30] sm:$0xff] %vm652, %v569
          %660 = vst.msk [vmem:[#allocation2 + $0x38] sm:$0xff] %vm652, %v571
          %661 = vst.msk [vmem:[#allocation2 + $0x40] sm:$0xff] %vm652, %v573
          %662 = vst.msk [vmem:[#allocation2 + $0x48] sm:$0xff] %vm652, %v575
          %663 = vst.msk [vmem:[#allocation2 + $0x50] sm:$0xff] %vm652, %v577
          %664 = vst.msk [vmem:[#allocation2 + $0x58] sm:$0xff] %vm652, %v579
          %665 = vst.msk [vmem:[#allocation2 + $0x60] sm:$0xff] %vm652, %v581
          %666 = vst.msk [vmem:[#allocation2 + $0x68] sm:$0xff] %vm652, %v583
          %667 = vst.msk [vmem:[#allocation2 + $0x70] sm:$0xff] %vm652, %v585
          %668 = vst.msk [vmem:[#allocation2 + $0x78] sm:$0xff] %vm652, %v587
          %669 = vst.msk [vmem:[#allocation2 + $0x80] sm:$0xff] %vm652, %v589
          %670 = vst.msk [vmem:[#allocation2 + $0x88] sm:$0xff] %vm652, %v591
          %671 = vst.msk [vmem:[#allocation2 + $0x90] sm:$0xff] %vm652, %v593
          %672 = vst.msk [vmem:[#allocation2 + $0x98] sm:$0xff] %vm652, %v595
          %673 = vst.msk [vmem:[#allocation2 + $0xa0] sm:$0xff] %vm652, %v597
          %674 = vst.msk [vmem:[#allocation2 + $0xa8] sm:$0xff] %vm652, %v599
          %675 = vst.msk [vmem:[#allocation2 + $0xb0] sm:$0xff] %vm652, %v601
          %676 = vst.msk [vmem:[#allocation2 + $0xb8] sm:$0xff] %vm652, %v603
          %677 = vst.msk [vmem:[#allocation2 + $0xc0] sm:$0xff] %vm652, %v605
          %678 = vst.msk [vmem:[#allocation2 + $0xc8] sm:$0xff] %vm652, %v607
          %679 = vst.msk [vmem:[#allocation2 + $0xd0] sm:$0xff] %vm652, %v609
          %680 = vst.msk [vmem:[#allocation2 + $0xd8] sm:$0xff] %vm652, %v611
          %681 = vst.msk [vmem:[#allocation2 + $0xe0] sm:$0xff] %vm652, %v613
          %682 = vst.msk [vmem:[#allocation2 + $0xe8] sm:$0xff] %vm652, %v615
          %683 = vst.msk [vmem:[#allocation2 + $0xf0] sm:$0xff] %vm652, %v617
          %684 = vst.msk [vmem:[#allocation2 + $0xf8] sm:$0xff] %vm652, %v619
          %s685 = sadd.s32 %s227, 1
          %s686 = smul.u32 %s685, 24
          %s687 = scalar_lea.vmem %s217, %s686
          %v688 = vld [vmem:[%s687] sm:$0xff]
          %v689 = vld [vmem:[%s687 + $0x8] sm:$0xff]
          %v690 = vld [vmem:[%s687 + $0x18] sm:$0xff]
          %v691 = vld [vmem:[%s687 + $0x20] sm:$0xff]
          %v692 = vld [vmem:[%s687 + $0x30] sm:$0xff]
          %v693 = vld [vmem:[%s687 + $0x38] sm:$0xff]
          %v694 = vld [vmem:[%s687 + $0x48] sm:$0xff]
          %v695 = vld [vmem:[%s687 + $0x50] sm:$0xff]
          %v696 = vld [vmem:[%s687 + $0x60] sm:$0xff]
          %v697 = vld [vmem:[%s687 + $0x68] sm:$0xff]
          %v698 = vld [vmem:[%s687 + $0x78] sm:$0xff]
          %v699 = vld [vmem:[%s687 + $0x80] sm:$0xff]
          %v700 = vld [vmem:[%s687 + $0x90] sm:$0xff]
          %v701 = vld [vmem:[%s687 + $0x98] sm:$0xff]
          %v702 = vld [vmem:[%s687 + $0xa8] sm:$0xff]
          %v703 = vld [vmem:[%s687 + $0xb0] sm:$0xff]
          %v704 = vld [vmem:[%s687 + $0xc0] sm:$0xff]
          %v705 = vld [vmem:[%s687 + $0xc8] sm:$0xff]
          %v706 = vld [vmem:[%s687 + $0xd8] sm:$0xff]
          %v707 = vld [vmem:[%s687 + $0xe0] sm:$0xff]
          %v708 = vld [vmem:[%s687 + $0xf0] sm:$0xff]
          %v709 = vld [vmem:[%s687 + $0xf8] sm:$0xff]
          %v710 = vld [vmem:[%s687 + $0x108] sm:$0xff]
          %v711 = vld [vmem:[%s687 + $0x110] sm:$0xff]
          %v712 = vld [vmem:[%s687 + $0x120] sm:$0xff]
          %v713 = vld [vmem:[%s687 + $0x128] sm:$0xff]
          %v714 = vld [vmem:[%s687 + $0x138] sm:$0xff]
          %v715 = vld [vmem:[%s687 + $0x140] sm:$0xff]
          %v716 = vld [vmem:[%s687 + $0x150] sm:$0xff]
          %v717 = vld [vmem:[%s687 + $0x158] sm:$0xff]
          %v718 = vld [vmem:[%s687 + $0x168] sm:$0xff]
          %v719 = vld [vmem:[%s687 + $0x170] sm:$0xff]
          %752 = vrot.lane.b32.xlu0 %v688, 12
          %v753 = vpop.permute.xlu0 %752
          %754 = vrot.lane.b32.xlu0 %v689, 12
          %v755 = vpop.permute.xlu0 %754
          %756 = vrot.lane.b32.xlu0 %v690, 12
          %v757 = vpop.permute.xlu0 %756
          %758 = vrot.lane.b32.xlu0 %v691, 12
          %v759 = vpop.permute.xlu0 %758
          %760 = vrot.lane.b32.xlu0 %v692, 12
          %v761 = vpop.permute.xlu0 %760
          %762 = vrot.lane.b32.xlu0 %v693, 12
          %v763 = vpop.permute.xlu0 %762
          %764 = vrot.lane.b32.xlu0 %v694, 12
          %v765 = vpop.permute.xlu0 %764
          %766 = vrot.lane.b32.xlu0 %v695, 12
          %v767 = vpop.permute.xlu0 %766
          %768 = vrot.lane.b32.xlu0 %v696, 12
          %v769 = vpop.permute.xlu0 %768
          %770 = vrot.lane.b32.xlu0 %v697, 12
          %v771 = vpop.permute.xlu0 %770
          %772 = vrot.lane.b32.xlu0 %v698, 12
          %v773 = vpop.permute.xlu0 %772
          %774 = vrot.lane.b32.xlu0 %v699, 12
          %v775 = vpop.permute.xlu0 %774
          %776 = vrot.lane.b32.xlu0 %v700, 12
          %v777 = vpop.permute.xlu0 %776
          %778 = vrot.lane.b32.xlu0 %v701, 12
          %v779 = vpop.permute.xlu0 %778
          %780 = vrot.lane.b32.xlu0 %v702, 12
          %v781 = vpop.permute.xlu0 %780
          %782 = vrot.lane.b32.xlu0 %v703, 12
          %v783 = vpop.permute.xlu0 %782
          %784 = vrot.lane.b32.xlu0 %v704, 12
          %v785 = vpop.permute.xlu0 %784
          %786 = vrot.lane.b32.xlu0 %v705, 12
          %v787 = vpop.permute.xlu0 %786
          %788 = vrot.lane.b32.xlu0 %v706, 12
          %v789 = vpop.permute.xlu0 %788
          %790 = vrot.lane.b32.xlu0 %v707, 12
          %v791 = vpop.permute.xlu0 %790
          %792 = vrot.lane.b32.xlu0 %v708, 12
          %v793 = vpop.permute.xlu0 %792
          %794 = vrot.lane.b32.xlu0 %v709, 12
          %v795 = vpop.permute.xlu0 %794
          %796 = vrot.lane.b32.xlu0 %v710, 12
          %v797 = vpop.permute.xlu0 %796
          %798 = vrot.lane.b32.xlu0 %v711, 12
          %v799 = vpop.permute.xlu0 %798
          %800 = vrot.lane.b32.xlu0 %v712, 12
          %v801 = vpop.permute.xlu0 %800
          %802 = vrot.lane.b32.xlu0 %v713, 12
          %v803 = vpop.permute.xlu0 %802
          %804 = vrot.lane.b32.xlu0 %v714, 12
          %v805 = vpop.permute.xlu0 %804
          %806 = vrot.lane.b32.xlu0 %v715, 12
          %v807 = vpop.permute.xlu0 %806
          %808 = vrot.lane.b32.xlu0 %v716, 12
          %v809 = vpop.permute.xlu0 %808
          %810 = vrot.lane.b32.xlu0 %v717, 12
          %v811 = vpop.permute.xlu0 %810
          %812 = vrot.lane.b32.xlu0 %v718, 12
          %v813 = vpop.permute.xlu0 %812
          %814 = vrot.lane.b32.xlu0 %v719, 12
          %v815 = vpop.permute.xlu0 %814
          %vm848 = vcmask 130144
          %849 = vst.msk [vmem:[#allocation2] sm:$0xff] %vm848, %v753
          %850 = vst.msk [vmem:[#allocation2 + $0x8] sm:$0xff] %vm848, %v755
          %851 = vst.msk [vmem:[#allocation2 + $0x10] sm:$0xff] %vm848, %v757
          %852 = vst.msk [vmem:[#allocation2 + $0x18] sm:$0xff] %vm848, %v759
          %853 = vst.msk [vmem:[#allocation2 + $0x20] sm:$0xff] %vm848, %v761
          %854 = vst.msk [vmem:[#allocation2 + $0x28] sm:$0xff] %vm848, %v763
          %855 = vst.msk [vmem:[#allocation2 + $0x30] sm:$0xff] %vm848, %v765
          %856 = vst.msk [vmem:[#allocation2 + $0x38] sm:$0xff] %vm848, %v767
          %857 = vst.msk [vmem:[#allocation2 + $0x40] sm:$0xff] %vm848, %v769
          %858 = vst.msk [vmem:[#allocation2 + $0x48] sm:$0xff] %vm848, %v771
          %859 = vst.msk [vmem:[#allocation2 + $0x50] sm:$0xff] %vm848, %v773
          %860 = vst.msk [vmem:[#allocation2 + $0x58] sm:$0xff] %vm848, %v775
          %861 = vst.msk [vmem:[#allocation2 + $0x60] sm:$0xff] %vm848, %v777
          %862 = vst.msk [vmem:[#allocation2 + $0x68] sm:$0xff] %vm848, %v779
          %863 = vst.msk [vmem:[#allocation2 + $0x70] sm:$0xff] %vm848, %v781
          %864 = vst.msk [vmem:[#allocation2 + $0x78] sm:$0xff] %vm848, %v783
          %865 = vst.msk [vmem:[#allocation2 + $0x80] sm:$0xff] %vm848, %v785
          %866 = vst.msk [vmem:[#allocation2 + $0x88] sm:$0xff] %vm848, %v787
          %867 = vst.msk [vmem:[#allocation2 + $0x90] sm:$0xff] %vm848, %v789
          %868 = vst.msk [vmem:[#allocation2 + $0x98] sm:$0xff] %vm848, %v791
          %869 = vst.msk [vmem:[#allocation2 + $0xa0] sm:$0xff] %vm848, %v793
          %870 = vst.msk [vmem:[#allocation2 + $0xa8] sm:$0xff] %vm848, %v795
          %871 = vst.msk [vmem:[#allocation2 + $0xb0] sm:$0xff] %vm848, %v797
          %872 = vst.msk [vmem:[#allocation2 + $0xb8] sm:$0xff] %vm848, %v799
          %873 = vst.msk [vmem:[#allocation2 + $0xc0] sm:$0xff] %vm848, %v801
          %874 = vst.msk [vmem:[#allocation2 + $0xc8] sm:$0xff] %vm848, %v803
          %875 = vst.msk [vmem:[#allocation2 + $0xd0] sm:$0xff] %vm848, %v805
          %876 = vst.msk [vmem:[#allocation2 + $0xd8] sm:$0xff] %vm848, %v807
          %877 = vst.msk [vmem:[#allocation2 + $0xe0] sm:$0xff] %vm848, %v809
          %878 = vst.msk [vmem:[#allocation2 + $0xe8] sm:$0xff] %vm848, %v811
          %879 = vst.msk [vmem:[#allocation2 + $0xf0] sm:$0xff] %vm848, %v813
          %880 = vst.msk [vmem:[#allocation2 + $0xf8] sm:$0xff] %vm848, %v815
          %v881 = vld [vmem:[%s687 + $0x1] sm:$0xff]
          %v882 = vld [vmem:[%s687 + $0x9] sm:$0xff]
          %v883 = vld [vmem:[%s687 + $0x19] sm:$0xff]
          %v884 = vld [vmem:[%s687 + $0x21] sm:$0xff]
          %v885 = vld [vmem:[%s687 + $0x31] sm:$0xff]
          %v886 = vld [vmem:[%s687 + $0x39] sm:$0xff]
          %v887 = vld [vmem:[%s687 + $0x49] sm:$0xff]
          %v888 = vld [vmem:[%s687 + $0x51] sm:$0xff]
          %v889 = vld [vmem:[%s687 + $0x61] sm:$0xff]
          %v890 = vld [vmem:[%s687 + $0x69] sm:$0xff]
          %v891 = vld [vmem:[%s687 + $0x79] sm:$0xff]
          %v892 = vld [vmem:[%s687 + $0x81] sm:$0xff]
          %v893 = vld [vmem:[%s687 + $0x91] sm:$0xff]
          %v894 = vld [vmem:[%s687 + $0x99] sm:$0xff]
          %v895 = vld [vmem:[%s687 + $0xa9] sm:$0xff]
          %v896 = vld [vmem:[%s687 + $0xb1] sm:$0xff]
          %v897 = vld [vmem:[%s687 + $0xc1] sm:$0xff]
          %v898 = vld [vmem:[%s687 + $0xc9] sm:$0xff]
          %v899 = vld [vmem:[%s687 + $0xd9] sm:$0xff]
          %v900 = vld [vmem:[%s687 + $0xe1] sm:$0xff]
          %v901 = vld [vmem:[%s687 + $0xf1] sm:$0xff]
          %v902 = vld [vmem:[%s687 + $0xf9] sm:$0xff]
          %v903 = vld [vmem:[%s687 + $0x109] sm:$0xff]
          %v904 = vld [vmem:[%s687 + $0x111] sm:$0xff]
          %v905 = vld [vmem:[%s687 + $0x121] sm:$0xff]
          %v906 = vld [vmem:[%s687 + $0x129] sm:$0xff]
          %v907 = vld [vmem:[%s687 + $0x139] sm:$0xff]
          %v908 = vld [vmem:[%s687 + $0x141] sm:$0xff]
          %v909 = vld [vmem:[%s687 + $0x151] sm:$0xff]
          %v910 = vld [vmem:[%s687 + $0x159] sm:$0xff]
          %v911 = vld [vmem:[%s687 + $0x169] sm:$0xff]
          %v912 = vld [vmem:[%s687 + $0x171] sm:$0xff]
          %945 = vrot.lane.b32.xlu0 %v881, 16
          %v946 = vpop.permute.xlu0 %945
          %947 = vrot.lane.b32.xlu0 %v882, 16
          %v948 = vpop.permute.xlu0 %947
          %949 = vrot.lane.b32.xlu0 %v883, 16
          %v950 = vpop.permute.xlu0 %949
          %951 = vrot.lane.b32.xlu0 %v884, 16
          %v952 = vpop.permute.xlu0 %951
          %953 = vrot.lane.b32.xlu0 %v885, 16
          %v954 = vpop.permute.xlu0 %953
          %955 = vrot.lane.b32.xlu0 %v886, 16
          %v956 = vpop.permute.xlu0 %955
          %957 = vrot.lane.b32.xlu0 %v887, 16
          %v958 = vpop.permute.xlu0 %957
          %959 = vrot.lane.b32.xlu0 %v888, 16
          %v960 = vpop.permute.xlu0 %959
          %961 = vrot.lane.b32.xlu0 %v889, 16
          %v962 = vpop.permute.xlu0 %961
          %963 = vrot.lane.b32.xlu0 %v890, 16
          %v964 = vpop.permute.xlu0 %963
          %965 = vrot.lane.b32.xlu0 %v891, 16
          %v966 = vpop.permute.xlu0 %965
          %967 = vrot.lane.b32.xlu0 %v892, 16
          %v968 = vpop.permute.xlu0 %967
          %969 = vrot.lane.b32.xlu0 %v893, 16
          %v970 = vpop.permute.xlu0 %969
          %971 = vrot.lane.b32.xlu0 %v894, 16
          %v972 = vpop.permute.xlu0 %971
          %973 = vrot.lane.b32.xlu0 %v895, 16
          %v974 = vpop.permute.xlu0 %973
          %975 = vrot.lane.b32.xlu0 %v896, 16
          %v976 = vpop.permute.xlu0 %975
          %977 = vrot.lane.b32.xlu0 %v897, 16
          %v978 = vpop.permute.xlu0 %977
          %979 = vrot.lane.b32.xlu0 %v898, 16
          %v980 = vpop.permute.xlu0 %979
          %981 = vrot.lane.b32.xlu0 %v899, 16
          %v982 = vpop.permute.xlu0 %981
          %983 = vrot.lane.b32.xlu0 %v900, 16
          %v984 = vpop.permute.xlu0 %983
          %985 = vrot.lane.b32.xlu0 %v901, 16
          %v986 = vpop.permute.xlu0 %985
          %987 = vrot.lane.b32.xlu0 %v902, 16
          %v988 = vpop.permute.xlu0 %987
          %989 = vrot.lane.b32.xlu0 %v903, 16
          %v990 = vpop.permute.xlu0 %989
          %991 = vrot.lane.b32.xlu0 %v904, 16
          %v992 = vpop.permute.xlu0 %991
          %993 = vrot.lane.b32.xlu0 %v905, 16
          %v994 = vpop.permute.xlu0 %993
          %995 = vrot.lane.b32.xlu0 %v906, 16
          %v996 = vpop.permute.xlu0 %995
          %997 = vrot.lane.b32.xlu0 %v907, 16
          %v998 = vpop.permute.xlu0 %997
          %999 = vrot.lane.b32.xlu0 %v908, 16
          %v1000 = vpop.permute.xlu0 %999
          %1001 = vrot.lane.b32.xlu0 %v909, 16
          %v1002 = vpop.permute.xlu0 %1001
          %1003 = vrot.lane.b32.xlu0 %v910, 16
          %v1004 = vpop.permute.xlu0 %1003
          %1005 = vrot.lane.b32.xlu0 %v911, 16
          %v1006 = vpop.permute.xlu0 %1005
          %1007 = vrot.lane.b32.xlu0 %v912, 16
          %v1008 = vpop.permute.xlu0 %1007
          %vm1041 = vcmask 162944
          %1042 = vst.msk [vmem:[#allocation2] sm:$0xff] %vm1041, %v946
          %1043 = vst.msk [vmem:[#allocation2 + $0x8] sm:$0xff] %vm1041, %v948
          %1044 = vst.msk [vmem:[#allocation2 + $0x10] sm:$0xff] %vm1041, %v950
          %1045 = vst.msk [vmem:[#allocation2 + $0x18] sm:$0xff] %vm1041, %v952
          %1046 = vst.msk [vmem:[#allocation2 + $0x20] sm:$0xff] %vm1041, %v954
          %1047 = vst.msk [vmem:[#allocation2 + $0x28] sm:$0xff] %vm1041, %v956
          %1048 = vst.msk [vmem:[#allocation2 + $0x30] sm:$0xff] %vm1041, %v958
          %1049 = vst.msk [vmem:[#allocation2 + $0x38] sm:$0xff] %vm1041, %v960
          %1050 = vst.msk [vmem:[#allocation2 + $0x40] sm:$0xff] %vm1041, %v962
          %1051 = vst.msk [vmem:[#allocation2 + $0x48] sm:$0xff] %vm1041, %v964
          %1052 = vst.msk [vmem:[#allocation2 + $0x50] sm:$0xff] %vm1041, %v966
          %1053 = vst.msk [vmem:[#allocation2 + $0x58] sm:$0xff] %vm1041, %v968
          %1054 = vst.msk [vmem:[#allocation2 + $0x60] sm:$0xff] %vm1041, %v970
          %1055 = vst.msk [vmem:[#allocation2 + $0x68] sm:$0xff] %vm1041, %v972
          %1056 = vst.msk [vmem:[#allocation2 + $0x70] sm:$0xff] %vm1041, %v974
          %1057 = vst.msk [vmem:[#allocation2 + $0x78] sm:$0xff] %vm1041, %v976
          %1058 = vst.msk [vmem:[#allocation2 + $0x80] sm:$0xff] %vm1041, %v978
          %1059 = vst.msk [vmem:[#allocation2 + $0x88] sm:$0xff] %vm1041, %v980
          %1060 = vst.msk [vmem:[#allocation2 + $0x90] sm:$0xff] %vm1041, %v982
          %1061 = vst.msk [vmem:[#allocation2 + $0x98] sm:$0xff] %vm1041, %v984
          %1062 = vst.msk [vmem:[#allocation2 + $0xa0] sm:$0xff] %vm1041, %v986
          %1063 = vst.msk [vmem:[#allocation2 + $0xa8] sm:$0xff] %vm1041, %v988
          %1064 = vst.msk [vmem:[#allocation2 + $0xb0] sm:$0xff] %vm1041, %v990
          %1065 = vst.msk [vmem:[#allocation2 + $0xb8] sm:$0xff] %vm1041, %v992
          %1066 = vst.msk [vmem:[#allocation2 + $0xc0] sm:$0xff] %vm1041, %v994
          %1067 = vst.msk [vmem:[#allocation2 + $0xc8] sm:$0xff] %vm1041, %v996
          %1068 = vst.msk [vmem:[#allocation2 + $0xd0] sm:$0xff] %vm1041, %v998
          %1069 = vst.msk [vmem:[#allocation2 + $0xd8] sm:$0xff] %vm1041, %v1000
          %1070 = vst.msk [vmem:[#allocation2 + $0xe0] sm:$0xff] %vm1041, %v1002
          %1071 = vst.msk [vmem:[#allocation2 + $0xe8] sm:$0xff] %vm1041, %v1004
          %1072 = vst.msk [vmem:[#allocation2 + $0xf0] sm:$0xff] %vm1041, %v1006
          %1073 = vst.msk [vmem:[#allocation2 + $0xf8] sm:$0xff] %vm1041, %v1008
          %v1074 = vld [vmem:[%s687 + $0x2] sm:$0xff]
          %v1075 = vld [vmem:[%s687 + $0xa] sm:$0xff]
          %v1076 = vld [vmem:[%s687 + $0x1a] sm:$0xff]
          %v1077 = vld [vmem:[%s687 + $0x22] sm:$0xff]
          %v1078 = vld [vmem:[%s687 + $0x32] sm:$0xff]
          %v1079 = vld [vmem:[%s687 + $0x3a] sm:$0xff]
          %v1080 = vld [vmem:[%s687 + $0x4a] sm:$0xff]
          %v1081 = vld [vmem:[%s687 + $0x52] sm:$0xff]
          %v1082 = vld [vmem:[%s687 + $0x62] sm:$0xff]
          %v1083 = vld [vmem:[%s687 + $0x6a] sm:$0xff]
          %v1084 = vld [vmem:[%s687 + $0x7a] sm:$0xff]
          %v1085 = vld [vmem:[%s687 + $0x82] sm:$0xff]
          %v1086 = vld [vmem:[%s687 + $0x92] sm:$0xff]
          %v1087 = vld [vmem:[%s687 + $0x9a] sm:$0xff]
          %v1088 = vld [vmem:[%s687 + $0xaa] sm:$0xff]
          %v1089 = vld [vmem:[%s687 + $0xb2] sm:$0xff]
          %v1090 = vld [vmem:[%s687 + $0xc2] sm:$0xff]
          %v1091 = vld [vmem:[%s687 + $0xca] sm:$0xff]
          %v1092 = vld [vmem:[%s687 + $0xda] sm:$0xff]
          %v1093 = vld [vmem:[%s687 + $0xe2] sm:$0xff]
          %v1094 = vld [vmem:[%s687 + $0xf2] sm:$0xff]
          %v1095 = vld [vmem:[%s687 + $0xfa] sm:$0xff]
          %v1096 = vld [vmem:[%s687 + $0x10a] sm:$0xff]
          %v1097 = vld [vmem:[%s687 + $0x112] sm:$0xff]
          %v1098 = vld [vmem:[%s687 + $0x122] sm:$0xff]
          %v1099 = vld [vmem:[%s687 + $0x12a] sm:$0xff]
          %v1100 = vld [vmem:[%s687 + $0x13a] sm:$0xff]
          %v1101 = vld [vmem:[%s687 + $0x142] sm:$0xff]
          %v1102 = vld [vmem:[%s687 + $0x152] sm:$0xff]
          %v1103 = vld [vmem:[%s687 + $0x15a] sm:$0xff]
          %v1104 = vld [vmem:[%s687 + $0x16a] sm:$0xff]
          %v1105 = vld [vmem:[%s687 + $0x172] sm:$0xff]
          %1138 = vrot.lane.b32.xlu0 %v1074, 20
          %v1139 = vpop.permute.xlu0 %1138
          %1140 = vrot.lane.b32.xlu0 %v1075, 20
          %v1141 = vpop.permute.xlu0 %1140
          %1142 = vrot.lane.b32.xlu0 %v1076, 20
          %v1143 = vpop.permute.xlu0 %1142
          %1144 = vrot.lane.b32.xlu0 %v1077, 20
          %v1145 = vpop.permute.xlu0 %1144
          %1146 = vrot.lane.b32.xlu0 %v1078, 20
          %v1147 = vpop.permute.xlu0 %1146
          %1148 = vrot.lane.b32.xlu0 %v1079, 20
          %v1149 = vpop.permute.xlu0 %1148
          %1150 = vrot.lane.b32.xlu0 %v1080, 20
          %v1151 = vpop.permute.xlu0 %1150
          %1152 = vrot.lane.b32.xlu0 %v1081, 20
          %v1153 = vpop.permute.xlu0 %1152
          %1154 = vrot.lane.b32.xlu0 %v1082, 20
          %v1155 = vpop.permute.xlu0 %1154
          %1156 = vrot.lane.b32.xlu0 %v1083, 20
          %v1157 = vpop.permute.xlu0 %1156
          %1158 = vrot.lane.b32.xlu0 %v1084, 20
          %v1159 = vpop.permute.xlu0 %1158
          %1160 = vrot.lane.b32.xlu0 %v1085, 20
          %v1161 = vpop.permute.xlu0 %1160
          %1162 = vrot.lane.b32.xlu0 %v1086, 20
          %v1163 = vpop.permute.xlu0 %1162
          %1164 = vrot.lane.b32.xlu0 %v1087, 20
          %v1165 = vpop.permute.xlu0 %1164
          %1166 = vrot.lane.b32.xlu0 %v1088, 20
          %v1167 = vpop.permute.xlu0 %1166
          %1168 = vrot.lane.b32.xlu0 %v1089, 20
          %v1169 = vpop.permute.xlu0 %1168
          %1170 = vrot.lane.b32.xlu0 %v1090, 20
          %v1171 = vpop.permute.xlu0 %1170
          %1172 = vrot.lane.b32.xlu0 %v1091, 20
          %v1173 = vpop.permute.xlu0 %1172
          %1174 = vrot.lane.b32.xlu0 %v1092, 20
          %v1175 = vpop.permute.xlu0 %1174
          %1176 = vrot.lane.b32.xlu0 %v1093, 20
          %v1177 = vpop.permute.xlu0 %1176
          %1178 = vrot.lane.b32.xlu0 %v1094, 20
          %v1179 = vpop.permute.xlu0 %1178
          %1180 = vrot.lane.b32.xlu0 %v1095, 20
          %v1181 = vpop.permute.xlu0 %1180
          %1182 = vrot.lane.b32.xlu0 %v1096, 20
          %v1183 = vpop.permute.xlu0 %1182
          %1184 = vrot.lane.b32.xlu0 %v1097, 20
          %v1185 = vpop.permute.xlu0 %1184
          %1186 = vrot.lane.b32.xlu0 %v1098, 20
          %v1187 = vpop.permute.xlu0 %1186
          %1188 = vrot.lane.b32.xlu0 %v1099, 20
          %v1189 = vpop.permute.xlu0 %1188
          %1190 = vrot.lane.b32.xlu0 %v1100, 20
          %v1191 = vpop.permute.xlu0 %1190
          %1192 = vrot.lane.b32.xlu0 %v1101, 20
          %v1193 = vpop.permute.xlu0 %1192
          %1194 = vrot.lane.b32.xlu0 %v1102, 20
          %v1195 = vpop.permute.xlu0 %1194
          %1196 = vrot.lane.b32.xlu0 %v1103, 20
          %v1197 = vpop.permute.xlu0 %1196
          %1198 = vrot.lane.b32.xlu0 %v1104, 20
          %v1199 = vpop.permute.xlu0 %1198
          %1200 = vrot.lane.b32.xlu0 %v1105, 20
          %v1201 = vpop.permute.xlu0 %1200
          %vm1234 = vcmask 195744
          %1235 = vst.msk [vmem:[#allocation2] sm:$0xff] %vm1234, %v1139
          %1236 = vst.msk [vmem:[#allocation2 + $0x8] sm:$0xff] %vm1234, %v1141
          %1237 = vst.msk [vmem:[#allocation2 + $0x10] sm:$0xff] %vm1234, %v1143
          %1238 = vst.msk [vmem:[#allocation2 + $0x18] sm:$0xff] %vm1234, %v1145
          %1239 = vst.msk [vmem:[#allocation2 + $0x20] sm:$0xff] %vm1234, %v1147
          %1240 = vst.msk [vmem:[#allocation2 + $0x28] sm:$0xff] %vm1234, %v1149
          %1241 = vst.msk [vmem:[#allocation2 + $0x30] sm:$0xff] %vm1234, %v1151
          %1242 = vst.msk [vmem:[#allocation2 + $0x38] sm:$0xff] %vm1234, %v1153
          %1243 = vst.msk [vmem:[#allocation2 + $0x40] sm:$0xff] %vm1234, %v1155
          %1244 = vst.msk [vmem:[#allocation2 + $0x48] sm:$0xff] %vm1234, %v1157
          %1245 = vst.msk [vmem:[#allocation2 + $0x50] sm:$0xff] %vm1234, %v1159
          %1246 = vst.msk [vmem:[#allocation2 + $0x58] sm:$0xff] %vm1234, %v1161
          %1247 = vst.msk [vmem:[#allocation2 + $0x60] sm:$0xff] %vm1234, %v1163
          %1248 = vst.msk [vmem:[#allocation2 + $0x68] sm:$0xff] %vm1234, %v1165
          %1249 = vst.msk [vmem:[#allocation2 + $0x70] sm:$0xff] %vm1234, %v1167
          %1250 = vst.msk [vmem:[#allocation2 + $0x78] sm:$0xff] %vm1234, %v1169
          %1251 = vst.msk [vmem:[#allocation2 + $0x80] sm:$0xff] %vm1234, %v1171
          %1252 = vst.msk [vmem:[#allocation2 + $0x88] sm:$0xff] %vm1234, %v1173
          %1253 = vst.msk [vmem:[#allocation2 + $0x90] sm:$0xff] %vm1234, %v1175
          %1254 = vst.msk [vmem:[#allocation2 + $0x98] sm:$0xff] %vm1234, %v1177
          %1255 = vst.msk [vmem:[#allocation2 + $0xa0] sm:$0xff] %vm1234, %v1179
          %1256 = vst.msk [vmem:[#allocation2 + $0xa8] sm:$0xff] %vm1234, %v1181
          %1257 = vst.msk [vmem:[#allocation2 + $0xb0] sm:$0xff] %vm1234, %v1183
          %1258 = vst.msk [vmem:[#allocation2 + $0xb8] sm:$0xff] %vm1234, %v1185
          %1259 = vst.msk [vmem:[#allocation2 + $0xc0] sm:$0xff] %vm1234, %v1187
          %1260 = vst.msk [vmem:[#allocation2 + $0xc8] sm:$0xff] %vm1234, %v1189
          %1261 = vst.msk [vmem:[#allocation2 + $0xd0] sm:$0xff] %vm1234, %v1191
          %1262 = vst.msk [vmem:[#allocation2 + $0xd8] sm:$0xff] %vm1234, %v1193
          %1263 = vst.msk [vmem:[#allocation2 + $0xe0] sm:$0xff] %vm1234, %v1195
          %1264 = vst.msk [vmem:[#allocation2 + $0xe8] sm:$0xff] %vm1234, %v1197
          %1265 = vst.msk [vmem:[#allocation2 + $0xf0] sm:$0xff] %vm1234, %v1199
          %1266 = vst.msk [vmem:[#allocation2 + $0xf8] sm:$0xff] %vm1234, %v1201
          %s1267 = sadd.s32 %s227, 2
          %s1268 = smul.u32 %s1267, 24
          %s1269 = scalar_lea.vmem %s217, %s1268
          %v1270 = vld [vmem:[%s1269] sm:$0xff]
          %v1271 = vld [vmem:[%s1269 + $0x8] sm:$0xff]
          %v1272 = vld [vmem:[%s1269 + $0x18] sm:$0xff]
          %v1273 = vld [vmem:[%s1269 + $0x20] sm:$0xff]
          %v1274 = vld [vmem:[%s1269 + $0x30] sm:$0xff]
          %v1275 = vld [vmem:[%s1269 + $0x38] sm:$0xff]
          %v1276 = vld [vmem:[%s1269 + $0x48] sm:$0xff]
          %v1277 = vld [vmem:[%s1269 + $0x50] sm:$0xff]
          %v1278 = vld [vmem:[%s1269 + $0x60] sm:$0xff]
          %v1279 = vld [vmem:[%s1269 + $0x68] sm:$0xff]
          %v1280 = vld [vmem:[%s1269 + $0x78] sm:$0xff]
          %v1281 = vld [vmem:[%s1269 + $0x80] sm:$0xff]
          %v1282 = vld [vmem:[%s1269 + $0x90] sm:$0xff]
          %v1283 = vld [vmem:[%s1269 + $0x98] sm:$0xff]
          %v1284 = vld [vmem:[%s1269 + $0xa8] sm:$0xff]
          %v1285 = vld [vmem:[%s1269 + $0xb0] sm:$0xff]
          %v1286 = vld [vmem:[%s1269 + $0xc0] sm:$0xff]
          %v1287 = vld [vmem:[%s1269 + $0xc8] sm:$0xff]
          %v1288 = vld [vmem:[%s1269 + $0xd8] sm:$0xff]
          %v1289 = vld [vmem:[%s1269 + $0xe0] sm:$0xff]
          %v1290 = vld [vmem:[%s1269 + $0xf0] sm:$0xff]
          %v1291 = vld [vmem:[%s1269 + $0xf8] sm:$0xff]
          %v1292 = vld [vmem:[%s1269 + $0x108] sm:$0xff]
          %v1293 = vld [vmem:[%s1269 + $0x110] sm:$0xff]
          %v1294 = vld [vmem:[%s1269 + $0x120] sm:$0xff]
          %v1295 = vld [vmem:[%s1269 + $0x128] sm:$0xff]
          %v1296 = vld [vmem:[%s1269 + $0x138] sm:$0xff]
          %v1297 = vld [vmem:[%s1269 + $0x140] sm:$0xff]
          %v1298 = vld [vmem:[%s1269 + $0x150] sm:$0xff]
          %v1299 = vld [vmem:[%s1269 + $0x158] sm:$0xff]
          %v1300 = vld [vmem:[%s1269 + $0x168] sm:$0xff]
          %v1301 = vld [vmem:[%s1269 + $0x170] sm:$0xff]
          %1334 = vrot.lane.b32.xlu0 %v1270, 24
          %v1335 = vpop.permute.xlu0 %1334
          %1336 = vrot.lane.b32.xlu0 %v1271, 24
          %v1337 = vpop.permute.xlu0 %1336
          %1338 = vrot.lane.b32.xlu0 %v1272, 24
          %v1339 = vpop.permute.xlu0 %1338
          %1340 = vrot.lane.b32.xlu0 %v1273, 24
          %v1341 = vpop.permute.xlu0 %1340
          %1342 = vrot.lane.b32.xlu0 %v1274, 24
          %v1343 = vpop.permute.xlu0 %1342
          %1344 = vrot.lane.b32.xlu0 %v1275, 24
          %v1345 = vpop.permute.xlu0 %1344
          %1346 = vrot.lane.b32.xlu0 %v1276, 24
          %v1347 = vpop.permute.xlu0 %1346
          %1348 = vrot.lane.b32.xlu0 %v1277, 24
          %v1349 = vpop.permute.xlu0 %1348
          %1350 = vrot.lane.b32.xlu0 %v1278, 24
          %v1351 = vpop.permute.xlu0 %1350
          %1352 = vrot.lane.b32.xlu0 %v1279, 24
          %v1353 = vpop.permute.xlu0 %1352
          %1354 = vrot.lane.b32.xlu0 %v1280, 24
          %v1355 = vpop.permute.xlu0 %1354
          %1356 = vrot.lane.b32.xlu0 %v1281, 24
          %v1357 = vpop.permute.xlu0 %1356
          %1358 = vrot.lane.b32.xlu0 %v1282, 24
          %v1359 = vpop.permute.xlu0 %1358
          %1360 = vrot.lane.b32.xlu0 %v1283, 24
          %v1361 = vpop.permute.xlu0 %1360
          %1362 = vrot.lane.b32.xlu0 %v1284, 24
          %v1363 = vpop.permute.xlu0 %1362
          %1364 = vrot.lane.b32.xlu0 %v1285, 24
          %v1365 = vpop.permute.xlu0 %1364
          %1366 = vrot.lane.b32.xlu0 %v1286, 24
          %v1367 = vpop.permute.xlu0 %1366
          %1368 = vrot.lane.b32.xlu0 %v1287, 24
          %v1369 = vpop.permute.xlu0 %1368
          %1370 = vrot.lane.b32.xlu0 %v1288, 24
          %v1371 = vpop.permute.xlu0 %1370
          %1372 = vrot.lane.b32.xlu0 %v1289, 24
          %v1373 = vpop.permute.xlu0 %1372
          %1374 = vrot.lane.b32.xlu0 %v1290, 24
          %v1375 = vpop.permute.xlu0 %1374
          %1376 = vrot.lane.b32.xlu0 %v1291, 24
          %v1377 = vpop.permute.xlu0 %1376
          %1378 = vrot.lane.b32.xlu0 %v1292, 24
          %v1379 = vpop.permute.xlu0 %1378
          %1380 = vrot.lane.b32.xlu0 %v1293, 24
          %v1381 = vpop.permute.xlu0 %1380
          %1382 = vrot.lane.b32.xlu0 %v1294, 24
          %v1383 = vpop.permute.xlu0 %1382
          %1384 = vrot.lane.b32.xlu0 %v1295, 24
          %v1385 = vpop.permute.xlu0 %1384
          %1386 = vrot.lane.b32.xlu0 %v1296, 24
          %v1387 = vpop.permute.xlu0 %1386
          %1388 = vrot.lane.b32.xlu0 %v1297, 24
          %v1389 = vpop.permute.xlu0 %1388
          %1390 = vrot.lane.b32.xlu0 %v1298, 24
          %v1391 = vpop.permute.xlu0 %1390
          %1392 = vrot.lane.b32.xlu0 %v1299, 24
          %v1393 = vpop.permute.xlu0 %1392
          %1394 = vrot.lane.b32.xlu0 %v1300, 24
          %v1395 = vpop.permute.xlu0 %1394
          %1396 = vrot.lane.b32.xlu0 %v1301, 24
          %v1397 = vpop.permute.xlu0 %1396
          %vm1430 = vcmask 228544
          %1431 = vst.msk [vmem:[#allocation2] sm:$0xff] %vm1430, %v1335
          %1432 = vst.msk [vmem:[#allocation2 + $0x8] sm:$0xff] %vm1430, %v1337
          %1433 = vst.msk [vmem:[#allocation2 + $0x10] sm:$0xff] %vm1430, %v1339
          %1434 = vst.msk [vmem:[#allocation2 + $0x18] sm:$0xff] %vm1430, %v1341
          %1435 = vst.msk [vmem:[#allocation2 + $0x20] sm:$0xff] %vm1430, %v1343
          %1436 = vst.msk [vmem:[#allocation2 + $0x28] sm:$0xff] %vm1430, %v1345
          %1437 = vst.msk [vmem:[#allocation2 + $0x30] sm:$0xff] %vm1430, %v1347
          %1438 = vst.msk [vmem:[#allocation2 + $0x38] sm:$0xff] %vm1430, %v1349
          %1439 = vst.msk [vmem:[#allocation2 + $0x40] sm:$0xff] %vm1430, %v1351
          %1440 = vst.msk [vmem:[#allocation2 + $0x48] sm:$0xff] %vm1430, %v1353
          %1441 = vst.msk [vmem:[#allocation2 + $0x50] sm:$0xff] %vm1430, %v1355
          %1442 = vst.msk [vmem:[#allocation2 + $0x58] sm:$0xff] %vm1430, %v1357
          %1443 = vst.msk [vmem:[#allocation2 + $0x60] sm:$0xff] %vm1430, %v1359
          %1444 = vst.msk [vmem:[#allocation2 + $0x68] sm:$0xff] %vm1430, %v1361
          %1445 = vst.msk [vmem:[#allocation2 + $0x70] sm:$0xff] %vm1430, %v1363
          %1446 = vst.msk [vmem:[#allocation2 + $0x78] sm:$0xff] %vm1430, %v1365
          %1447 = vst.msk [vmem:[#allocation2 + $0x80] sm:$0xff] %vm1430, %v1367
          %1448 = vst.msk [vmem:[#allocation2 + $0x88] sm:$0xff] %vm1430, %v1369
          %1449 = vst.msk [vmem:[#allocation2 + $0x90] sm:$0xff] %vm1430, %v1371
          %1450 = vst.msk [vmem:[#allocation2 + $0x98] sm:$0xff] %vm1430, %v1373
          %1451 = vst.msk [vmem:[#allocation2 + $0xa0] sm:$0xff] %vm1430, %v1375
          %1452 = vst.msk [vmem:[#allocation2 + $0xa8] sm:$0xff] %vm1430, %v1377
          %1453 = vst.msk [vmem:[#allocation2 + $0xb0] sm:$0xff] %vm1430, %v1379
          %1454 = vst.msk [vmem:[#allocation2 + $0xb8] sm:$0xff] %vm1430, %v1381
          %1455 = vst.msk [vmem:[#allocation2 + $0xc0] sm:$0xff] %vm1430, %v1383
          %1456 = vst.msk [vmem:[#allocation2 + $0xc8] sm:$0xff] %vm1430, %v1385
          %1457 = vst.msk [vmem:[#allocation2 + $0xd0] sm:$0xff] %vm1430, %v1387
          %1458 = vst.msk [vmem:[#allocation2 + $0xd8] sm:$0xff] %vm1430, %v1389
          %1459 = vst.msk [vmem:[#allocation2 + $0xe0] sm:$0xff] %vm1430, %v1391
          %1460 = vst.msk [vmem:[#allocation2 + $0xe8] sm:$0xff] %vm1430, %v1393
          %1461 = vst.msk [vmem:[#allocation2 + $0xf0] sm:$0xff] %vm1430, %v1395
          %1462 = vst.msk [vmem:[#allocation2 + $0xf8] sm:$0xff] %vm1430, %v1397
          %v1463 = vld [vmem:[%s1269 + $0x1] sm:$0xff]
          %v1464 = vld [vmem:[%s1269 + $0x9] sm:$0xff]
          %v1465 = vld [vmem:[%s1269 + $0x19] sm:$0xff]
          %v1466 = vld [vmem:[%s1269 + $0x21] sm:$0xff]
          %v1467 = vld [vmem:[%s1269 + $0x31] sm:$0xff]
          %v1468 = vld [vmem:[%s1269 + $0x39] sm:$0xff]
          %v1469 = vld [vmem:[%s1269 + $0x49] sm:$0xff]
          %v1470 = vld [vmem:[%s1269 + $0x51] sm:$0xff]
          %v1471 = vld [vmem:[%s1269 + $0x61] sm:$0xff]
          %v1472 = vld [vmem:[%s1269 + $0x69] sm:$0xff]
          %v1473 = vld [vmem:[%s1269 + $0x79] sm:$0xff]
          %v1474 = vld [vmem:[%s1269 + $0x81] sm:$0xff]
          %v1475 = vld [vmem:[%s1269 + $0x91] sm:$0xff]
          %v1476 = vld [vmem:[%s1269 + $0x99] sm:$0xff]
          %v1477 = vld [vmem:[%s1269 + $0xa9] sm:$0xff]
          %v1478 = vld [vmem:[%s1269 + $0xb1] sm:$0xff]
          %v1479 = vld [vmem:[%s1269 + $0xc1] sm:$0xff]
          %v1480 = vld [vmem:[%s1269 + $0xc9] sm:$0xff]
          %v1481 = vld [vmem:[%s1269 + $0xd9] sm:$0xff]
          %v1482 = vld [vmem:[%s1269 + $0xe1] sm:$0xff]
          %v1483 = vld [vmem:[%s1269 + $0xf1] sm:$0xff]
          %v1484 = vld [vmem:[%s1269 + $0xf9] sm:$0xff]
          %v1485 = vld [vmem:[%s1269 + $0x109] sm:$0xff]
          %v1486 = vld [vmem:[%s1269 + $0x111] sm:$0xff]
          %v1487 = vld [vmem:[%s1269 + $0x121] sm:$0xff]
          %v1488 = vld [vmem:[%s1269 + $0x129] sm:$0xff]
          %v1489 = vld [vmem:[%s1269 + $0x139] sm:$0xff]
          %v1490 = vld [vmem:[%s1269 + $0x141] sm:$0xff]
          %v1491 = vld [vmem:[%s1269 + $0x151] sm:$0xff]
          %v1492 = vld [vmem:[%s1269 + $0x159] sm:$0xff]
          %v1493 = vld [vmem:[%s1269 + $0x169] sm:$0xff]
          %v1494 = vld [vmem:[%s1269 + $0x171] sm:$0xff]
          %1527 = vrot.lane.b32.xlu0 %v1463, 28
          %v1528 = vpop.permute.xlu0 %1527
          %1529 = vrot.lane.b32.xlu0 %v1464, 28
          %v1530 = vpop.permute.xlu0 %1529
          %1531 = vrot.lane.b32.xlu0 %v1465, 28
          %v1532 = vpop.permute.xlu0 %1531
          %1533 = vrot.lane.b32.xlu0 %v1466, 28
          %v1534 = vpop.permute.xlu0 %1533
          %1535 = vrot.lane.b32.xlu0 %v1467, 28
          %v1536 = vpop.permute.xlu0 %1535
          %1537 = vrot.lane.b32.xlu0 %v1468, 28
          %v1538 = vpop.permute.xlu0 %1537
          %1539 = vrot.lane.b32.xlu0 %v1469, 28
          %v1540 = vpop.permute.xlu0 %1539
          %1541 = vrot.lane.b32.xlu0 %v1470, 28
          %v1542 = vpop.permute.xlu0 %1541
          %1543 = vrot.lane.b32.xlu0 %v1471, 28
          %v1544 = vpop.permute.xlu0 %1543
          %1545 = vrot.lane.b32.xlu0 %v1472, 28
          %v1546 = vpop.permute.xlu0 %1545
          %1547 = vrot.lane.b32.xlu0 %v1473, 28
          %v1548 = vpop.permute.xlu0 %1547
          %1549 = vrot.lane.b32.xlu0 %v1474, 28
          %v1550 = vpop.permute.xlu0 %1549
          %1551 = vrot.lane.b32.xlu0 %v1475, 28
          %v1552 = vpop.permute.xlu0 %1551
          %1553 = vrot.lane.b32.xlu0 %v1476, 28
          %v1554 = vpop.permute.xlu0 %1553
          %1555 = vrot.lane.b32.xlu0 %v1477, 28
          %v1556 = vpop.permute.xlu0 %1555
          %1557 = vrot.lane.b32.xlu0 %v1478, 28
          %v1558 = vpop.permute.xlu0 %1557
          %1559 = vrot.lane.b32.xlu0 %v1479, 28
          %v1560 = vpop.permute.xlu0 %1559
          %1561 = vrot.lane.b32.xlu0 %v1480, 28
          %v1562 = vpop.permute.xlu0 %1561
          %1563 = vrot.lane.b32.xlu0 %v1481, 28
          %v1564 = vpop.permute.xlu0 %1563
          %1565 = vrot.lane.b32.xlu0 %v1482, 28
          %v1566 = vpop.permute.xlu0 %1565
          %1567 = vrot.lane.b32.xlu0 %v1483, 28
          %v1568 = vpop.permute.xlu0 %1567
          %1569 = vrot.lane.b32.xlu0 %v1484, 28
          %v1570 = vpop.permute.xlu0 %1569
          %1571 = vrot.lane.b32.xlu0 %v1485, 28
          %v1572 = vpop.permute.xlu0 %1571
          %1573 = vrot.lane.b32.xlu0 %v1486, 28
          %v1574 = vpop.permute.xlu0 %1573
          %1575 = vrot.lane.b32.xlu0 %v1487, 28
          %v1576 = vpop.permute.xlu0 %1575
          %1577 = vrot.lane.b32.xlu0 %v1488, 28
          %v1578 = vpop.permute.xlu0 %1577
          %1579 = vrot.lane.b32.xlu0 %v1489, 28
          %v1580 = vpop.permute.xlu0 %1579
          %1581 = vrot.lane.b32.xlu0 %v1490, 28
          %v1582 = vpop.permute.xlu0 %1581
          %1583 = vrot.lane.b32.xlu0 %v1491, 28
          %v1584 = vpop.permute.xlu0 %1583
          %1585 = vrot.lane.b32.xlu0 %v1492, 28
          %v1586 = vpop.permute.xlu0 %1585
          %1587 = vrot.lane.b32.xlu0 %v1493, 28
          %v1588 = vpop.permute.xlu0 %1587
          %1589 = vrot.lane.b32.xlu0 %v1494, 28
          %v1590 = vpop.permute.xlu0 %1589
          %vm1623 = vcmask 261344
          %1624 = vst.msk [vmem:[#allocation2] sm:$0xff] %vm1623, %v1528
          %1625 = vst.msk [vmem:[#allocation2 + $0x8] sm:$0xff] %vm1623, %v1530
          %1626 = vst.msk [vmem:[#allocation2 + $0x10] sm:$0xff] %vm1623, %v1532
          %1627 = vst.msk [vmem:[#allocation2 + $0x18] sm:$0xff] %vm1623, %v1534
          %1628 = vst.msk [vmem:[#allocation2 + $0x20] sm:$0xff] %vm1623, %v1536
          %1629 = vst.msk [vmem:[#allocation2 + $0x28] sm:$0xff] %vm1623, %v1538
          %1630 = vst.msk [vmem:[#allocation2 + $0x30] sm:$0xff] %vm1623, %v1540
          %1631 = vst.msk [vmem:[#allocation2 + $0x38] sm:$0xff] %vm1623, %v1542
          %1632 = vst.msk [vmem:[#allocation2 + $0x40] sm:$0xff] %vm1623, %v1544
          %1633 = vst.msk [vmem:[#allocation2 + $0x48] sm:$0xff] %vm1623, %v1546
          %1634 = vst.msk [vmem:[#allocation2 + $0x50] sm:$0xff] %vm1623, %v1548
          %1635 = vst.msk [vmem:[#allocation2 + $0x58] sm:$0xff] %vm1623, %v1550
          %1636 = vst.msk [vmem:[#allocation2 + $0x60] sm:$0xff] %vm1623, %v1552
          %1637 = vst.msk [vmem:[#allocation2 + $0x68] sm:$0xff] %vm1623, %v1554
          %1638 = vst.msk [vmem:[#allocation2 + $0x70] sm:$0xff] %vm1623, %v1556
          %1639 = vst.msk [vmem:[#allocation2 + $0x78] sm:$0xff] %vm1623, %v1558
          %1640 = vst.msk [vmem:[#allocation2 + $0x80] sm:$0xff] %vm1623, %v1560
          %1641 = vst.msk [vmem:[#allocation2 + $0x88] sm:$0xff] %vm1623, %v1562
          %1642 = vst.msk [vmem:[#allocation2 + $0x90] sm:$0xff] %vm1623, %v1564
          %1643 = vst.msk [vmem:[#allocation2 + $0x98] sm:$0xff] %vm1623, %v1566
          %1644 = vst.msk [vmem:[#allocation2 + $0xa0] sm:$0xff] %vm1623, %v1568
          %1645 = vst.msk [vmem:[#allocation2 + $0xa8] sm:$0xff] %vm1623, %v1570
          %1646 = vst.msk [vmem:[#allocation2 + $0xb0] sm:$0xff] %vm1623, %v1572
          %1647 = vst.msk [vmem:[#allocation2 + $0xb8] sm:$0xff] %vm1623, %v1574
          %1648 = vst.msk [vmem:[#allocation2 + $0xc0] sm:$0xff] %vm1623, %v1576
          %1649 = vst.msk [vmem:[#allocation2 + $0xc8] sm:$0xff] %vm1623, %v1578
          %1650 = vst.msk [vmem:[#allocation2 + $0xd0] sm:$0xff] %vm1623, %v1580
          %1651 = vst.msk [vmem:[#allocation2 + $0xd8] sm:$0xff] %vm1623, %v1582
          %1652 = vst.msk [vmem:[#allocation2 + $0xe0] sm:$0xff] %vm1623, %v1584
          %1653 = vst.msk [vmem:[#allocation2 + $0xe8] sm:$0xff] %vm1623, %v1586
          %1654 = vst.msk [vmem:[#allocation2 + $0xf0] sm:$0xff] %vm1623, %v1588
          %1655 = vst.msk [vmem:[#allocation2 + $0xf8] sm:$0xff] %vm1623, %v1590
          %v1656 = vld [vmem:[%s1269 + $0x2] sm:$0xff]
          %v1657 = vld [vmem:[%s1269 + $0xa] sm:$0xff]
          %v1658 = vld [vmem:[%s1269 + $0x1a] sm:$0xff]
          %v1659 = vld [vmem:[%s1269 + $0x22] sm:$0xff]
          %v1660 = vld [vmem:[%s1269 + $0x32] sm:$0xff]
          %v1661 = vld [vmem:[%s1269 + $0x3a] sm:$0xff]
          %v1662 = vld [vmem:[%s1269 + $0x4a] sm:$0xff]
          %v1663 = vld [vmem:[%s1269 + $0x52] sm:$0xff]
          %v1664 = vld [vmem:[%s1269 + $0x62] sm:$0xff]
          %v1665 = vld [vmem:[%s1269 + $0x6a] sm:$0xff]
          %v1666 = vld [vmem:[%s1269 + $0x7a] sm:$0xff]
          %v1667 = vld [vmem:[%s1269 + $0x82] sm:$0xff]
          %v1668 = vld [vmem:[%s1269 + $0x92] sm:$0xff]
          %v1669 = vld [vmem:[%s1269 + $0x9a] sm:$0xff]
          %v1670 = vld [vmem:[%s1269 + $0xaa] sm:$0xff]
          %v1671 = vld [vmem:[%s1269 + $0xb2] sm:$0xff]
          %v1672 = vld [vmem:[%s1269 + $0xc2] sm:$0xff]
          %v1673 = vld [vmem:[%s1269 + $0xca] sm:$0xff]
          %v1674 = vld [vmem:[%s1269 + $0xda] sm:$0xff]
          %v1675 = vld [vmem:[%s1269 + $0xe2] sm:$0xff]
          %v1676 = vld [vmem:[%s1269 + $0xf2] sm:$0xff]
          %v1677 = vld [vmem:[%s1269 + $0xfa] sm:$0xff]
          %v1678 = vld [vmem:[%s1269 + $0x10a] sm:$0xff]
          %v1679 = vld [vmem:[%s1269 + $0x112] sm:$0xff]
          %v1680 = vld [vmem:[%s1269 + $0x122] sm:$0xff]
          %v1681 = vld [vmem:[%s1269 + $0x12a] sm:$0xff]
          %v1682 = vld [vmem:[%s1269 + $0x13a] sm:$0xff]
          %v1683 = vld [vmem:[%s1269 + $0x142] sm:$0xff]
          %v1684 = vld [vmem:[%s1269 + $0x152] sm:$0xff]
          %v1685 = vld [vmem:[%s1269 + $0x15a] sm:$0xff]
          %v1686 = vld [vmem:[%s1269 + $0x16a] sm:$0xff]
          %v1687 = vld [vmem:[%s1269 + $0x172] sm:$0xff]
          %1720 = vrot.lane.b32.xlu0 %v1656, 32
          %v1721 = vpop.permute.xlu0 %1720
          %1722 = vrot.lane.b32.xlu0 %v1657, 32
          %v1723 = vpop.permute.xlu0 %1722
          %1724 = vrot.lane.b32.xlu0 %v1658, 32
          %v1725 = vpop.permute.xlu0 %1724
          %1726 = vrot.lane.b32.xlu0 %v1659, 32
          %v1727 = vpop.permute.xlu0 %1726
          %1728 = vrot.lane.b32.xlu0 %v1660, 32
          %v1729 = vpop.permute.xlu0 %1728
          %1730 = vrot.lane.b32.xlu0 %v1661, 32
          %v1731 = vpop.permute.xlu0 %1730
          %1732 = vrot.lane.b32.xlu0 %v1662, 32
          %v1733 = vpop.permute.xlu0 %1732
          %1734 = vrot.lane.b32.xlu0 %v1663, 32
          %v1735 = vpop.permute.xlu0 %1734
          %1736 = vrot.lane.b32.xlu0 %v1664, 32
          %v1737 = vpop.permute.xlu0 %1736
          %1738 = vrot.lane.b32.xlu0 %v1665, 32
          %v1739 = vpop.permute.xlu0 %1738
          %1740 = vrot.lane.b32.xlu0 %v1666, 32
          %v1741 = vpop.permute.xlu0 %1740
          %1742 = vrot.lane.b32.xlu0 %v1667, 32
          %v1743 = vpop.permute.xlu0 %1742
          %1744 = vrot.lane.b32.xlu0 %v1668, 32
          %v1745 = vpop.permute.xlu0 %1744
          %1746 = vrot.lane.b32.xlu0 %v1669, 32
          %v1747 = vpop.permute.xlu0 %1746
          %1748 = vrot.lane.b32.xlu0 %v1670, 32
          %v1749 = vpop.permute.xlu0 %1748
          %1750 = vrot.lane.b32.xlu0 %v1671, 32
          %v1751 = vpop.permute.xlu0 %1750
          %1752 = vrot.lane.b32.xlu0 %v1672, 32
          %v1753 = vpop.permute.xlu0 %1752
          %1754 = vrot.lane.b32.xlu0 %v1673, 32
          %v1755 = vpop.permute.xlu0 %1754
          %1756 = vrot.lane.b32.xlu0 %v1674, 32
          %v1757 = vpop.permute.xlu0 %1756
          %1758 = vrot.lane.b32.xlu0 %v1675, 32
          %v1759 = vpop.permute.xlu0 %1758
          %1760 = vrot.lane.b32.xlu0 %v1676, 32
          %v1761 = vpop.permute.xlu0 %1760
          %1762 = vrot.lane.b32.xlu0 %v1677, 32
          %v1763 = vpop.permute.xlu0 %1762
          %1764 = vrot.lane.b32.xlu0 %v1678, 32
          %v1765 = vpop.permute.xlu0 %1764
          %1766 = vrot.lane.b32.xlu0 %v1679, 32
          %v1767 = vpop.permute.xlu0 %1766
          %1768 = vrot.lane.b32.xlu0 %v1680, 32
          %v1769 = vpop.permute.xlu0 %1768
          %1770 = vrot.lane.b32.xlu0 %v1681, 32
          %v1771 = vpop.permute.xlu0 %1770
          %1772 = vrot.lane.b32.xlu0 %v1682, 32
          %v1773 = vpop.permute.xlu0 %1772
          %1774 = vrot.lane.b32.xlu0 %v1683, 32
          %v1775 = vpop.permute.xlu0 %1774
          %1776 = vrot.lane.b32.xlu0 %v1684, 32
          %v1777 = vpop.permute.xlu0 %1776
          %1778 = vrot.lane.b32.xlu0 %v1685, 32
          %v1779 = vpop.permute.xlu0 %1778
          %1780 = vrot.lane.b32.xlu0 %v1686, 32
          %v1781 = vpop.permute.xlu0 %1780
          %1782 = vrot.lane.b32.xlu0 %v1687, 32
          %v1783 = vpop.permute.xlu0 %1782
          %vm1816 = vcmask 294144
          %1817 = vst.msk [vmem:[#allocation2] sm:$0xff] %vm1816, %v1721
          %1818 = vst.msk [vmem:[#allocation2 + $0x8] sm:$0xff] %vm1816, %v1723
          %1819 = vst.msk [vmem:[#allocation2 + $0x10] sm:$0xff] %vm1816, %v1725
          %1820 = vst.msk [vmem:[#allocation2 + $0x18] sm:$0xff] %vm1816, %v1727
          %1821 = vst.msk [vmem:[#allocation2 + $0x20] sm:$0xff] %vm1816, %v1729
          %1822 = vst.msk [vmem:[#allocation2 + $0x28] sm:$0xff] %vm1816, %v1731
          %1823 = vst.msk [vmem:[#allocation2 + $0x30] sm:$0xff] %vm1816, %v1733
          %1824 = vst.msk [vmem:[#allocation2 + $0x38] sm:$0xff] %vm1816, %v1735
          %1825 = vst.msk [vmem:[#allocation2 + $0x40] sm:$0xff] %vm1816, %v1737
          %1826 = vst.msk [vmem:[#allocation2 + $0x48] sm:$0xff] %vm1816, %v1739
          %1827 = vst.msk [vmem:[#allocation2 + $0x50] sm:$0xff] %vm1816, %v1741
          %1828 = vst.msk [vmem:[#allocation2 + $0x58] sm:$0xff] %vm1816, %v1743
          %1829 = vst.msk [vmem:[#allocation2 + $0x60] sm:$0xff] %vm1816, %v1745
          %1830 = vst.msk [vmem:[#allocation2 + $0x68] sm:$0xff] %vm1816, %v1747
          %1831 = vst.msk [vmem:[#allocation2 + $0x70] sm:$0xff] %vm1816, %v1749
          %1832 = vst.msk [vmem:[#allocation2 + $0x78] sm:$0xff] %vm1816, %v1751
          %1833 = vst.msk [vmem:[#allocation2 + $0x80] sm:$0xff] %vm1816, %v1753
          %1834 = vst.msk [vmem:[#allocation2 + $0x88] sm:$0xff] %vm1816, %v1755
          %1835 = vst.msk [vmem:[#allocation2 + $0x90] sm:$0xff] %vm1816, %v1757
          %1836 = vst.msk [vmem:[#allocation2 + $0x98] sm:$0xff] %vm1816, %v1759
          %1837 = vst.msk [vmem:[#allocation2 + $0xa0] sm:$0xff] %vm1816, %v1761
          %1838 = vst.msk [vmem:[#allocation2 + $0xa8] sm:$0xff] %vm1816, %v1763
          %1839 = vst.msk [vmem:[#allocation2 + $0xb0] sm:$0xff] %vm1816, %v1765
          %1840 = vst.msk [vmem:[#allocation2 + $0xb8] sm:$0xff] %vm1816, %v1767
          %1841 = vst.msk [vmem:[#allocation2 + $0xc0] sm:$0xff] %vm1816, %v1769
          %1842 = vst.msk [vmem:[#allocation2 + $0xc8] sm:$0xff] %vm1816, %v1771
          %1843 = vst.msk [vmem:[#allocation2 + $0xd0] sm:$0xff] %vm1816, %v1773
          %1844 = vst.msk [vmem:[#allocation2 + $0xd8] sm:$0xff] %vm1816, %v1775
          %1845 = vst.msk [vmem:[#allocation2 + $0xe0] sm:$0xff] %vm1816, %v1777
          %1846 = vst.msk [vmem:[#allocation2 + $0xe8] sm:$0xff] %vm1816, %v1779
          %1847 = vst.msk [vmem:[#allocation2 + $0xf0] sm:$0xff] %vm1816, %v1781
          %1848 = vst.msk [vmem:[#allocation2 + $0xf8] sm:$0xff] %vm1816, %v1783
        $region36: #{tpu_custom_call.1} parent=31 // pred_fallthru
          _
        %v1849 = vld [vmem:[#allocation2] sm:$0xff]
        %v1850 = vld [vmem:[#allocation2 + $0x8] sm:$0xff]
        %v1851 = vld [vmem:[#allocation2 + $0x10] sm:$0xff]
        %v1852 = vld [vmem:[#allocation2 + $0x18] sm:$0xff]
        %v1853 = vld [vmem:[#allocation2 + $0x20] sm:$0xff]
        %v1854 = vld [vmem:[#allocation2 + $0x28] sm:$0xff]
        %v1855 = vld [vmem:[#allocation2 + $0x30] sm:$0xff]
        %v1856 = vld [vmem:[#allocation2 + $0x38] sm:$0xff]
        %v1857 = vld [vmem:[#allocation2 + $0x40] sm:$0xff]
        %v1858 = vld [vmem:[#allocation2 + $0x48] sm:$0xff]
        %v1859 = vld [vmem:[#allocation2 + $0x50] sm:$0xff]
        %v1860 = vld [vmem:[#allocation2 + $0x58] sm:$0xff]
        %v1861 = vld [vmem:[#allocation2 + $0x60] sm:$0xff]
        %v1862 = vld [vmem:[#allocation2 + $0x68] sm:$0xff]
        %v1863 = vld [vmem:[#allocation2 + $0x70] sm:$0xff]
        %v1864 = vld [vmem:[#allocation2 + $0x78] sm:$0xff]
        %v1865 = vld [vmem:[#allocation2 + $0x80] sm:$0xff]
        %v1866 = vld [vmem:[#allocation2 + $0x88] sm:$0xff]
        %v1867 = vld [vmem:[#allocation2 + $0x90] sm:$0xff]
        %v1868 = vld [vmem:[#allocation2 + $0x98] sm:$0xff]
        %v1869 = vld [vmem:[#allocation2 + $0xa0] sm:$0xff]
        %v1870 = vld [vmem:[#allocation2 + $0xa8] sm:$0xff]
        %v1871 = vld [vmem:[#allocation2 + $0xb0] sm:$0xff]
        %v1872 = vld [vmem:[#allocation2 + $0xb8] sm:$0xff]
        %v1873 = vld [vmem:[#allocation2 + $0xc0] sm:$0xff]
        %v1874 = vld [vmem:[#allocation2 + $0xc8] sm:$0xff]
        %v1875 = vld [vmem:[#allocation2 + $0xd0] sm:$0xff]
        %v1876 = vld [vmem:[#allocation2 + $0xd8] sm:$0xff]
        %v1877 = vld [vmem:[#allocation2 + $0xe0] sm:$0xff]
        %v1878 = vld [vmem:[#allocation2 + $0xe8] sm:$0xff]
        %v1879 = vld [vmem:[#allocation2 + $0xf0] sm:$0xff]
        %v1880 = vld [vmem:[#allocation2 + $0xf8] sm:$0xff]
        %v1881 = vld [vmem:[%s221] sm:$0xff]
        %v1882 = vld [vmem:[%s221 + $0x8] sm:$0xff]
        %v1883 = vld [vmem:[%s221 + $0x10] sm:$0xff]
        %v1884 = vld [vmem:[%s221 + $0x18] sm:$0xff]
        %v1885 = vld [vmem:[%s221 + $0x20] sm:$0xf]
        %vm1886 = vcmask 293888
        %v1888 = vsel %vm1886, %v1849, 0
        %v1891 = vsel %vm1886, %v1850, 0
        %v1894 = vsel %vm1886, %v1851, 0
        %v1897 = vsel %vm1886, %v1852, 0
        %v1900 = vsel %vm1886, %v1853, 0
        %v1903 = vsel %vm1886, %v1854, 0
        %v1906 = vsel %vm1886, %v1855, 0
        %v1909 = vsel %vm1886, %v1856, 0
        %v1912 = vsel %vm1886, %v1857, 0
        %v1915 = vsel %vm1886, %v1858, 0
        %v1918 = vsel %vm1886, %v1859, 0
        %v1921 = vsel %vm1886, %v1860, 0
        %v1924 = vsel %vm1886, %v1861, 0
        %v1927 = vsel %vm1886, %v1862, 0
        %v1930 = vsel %vm1886, %v1863, 0
        %v1933 = vsel %vm1886, %v1864, 0
        %v1936 = vsel %vm1886, %v1865, 0
        %v1939 = vsel %vm1886, %v1866, 0
        %v1942 = vsel %vm1886, %v1867, 0
        %v1945 = vsel %vm1886, %v1868, 0
        %v1948 = vsel %vm1886, %v1869, 0
        %v1951 = vsel %vm1886, %v1870, 0
        %v1954 = vsel %vm1886, %v1871, 0
        %v1957 = vsel %vm1886, %v1872, 0
        %v1960 = vsel %vm1886, %v1873, 0
        %v1963 = vsel %vm1886, %v1874, 0
        %v1966 = vsel %vm1886, %v1875, 0
        %v1969 = vsel %vm1886, %v1876, 0
        %v1972 = vsel %vm1886, %v1877, 0
        %v1975 = vsel %vm1886, %v1878, 0
        %v1978 = vsel %vm1886, %v1879, 0
        %v1981 = vsel %vm1886, %v1880, 0
        %vm1983 = vcmask 1043456
        %v1985 = vsel %vm1983, %v1885, 0
        %1987 = vmatpush.msra.mxu0 0.0
        %1988 = vmatpush.msra.mxu0 0.0
        %1989 = vmatpush.msra.mxu0 0.0
        %1990 = vmatpush.msra.mxu0 0.0
        %1991 = vmatpush.msra.mxu0 0.0
        %1992 = vmatpush.msra.mxu0 0.0
        %1993 = vmatpush.msra.mxu0 0.0
        %1994 = vmatpush.msra.mxu0 0.0
        %1995 = vmatpush.msra.mxu0 0.0
        %1996 = vmatpush.msra.mxu0 0.0
        %1997 = vmatpush.msra.mxu0 0.0
        %1998 = vmatpush.msra.mxu0 %v1985
        %1999 = vmatpush.msra.mxu0 %v1884
        %2000 = vmatpush.msra.mxu0 %v1883
        %2001 = vmatpush.msra.mxu0 %v1882
        %2002 = vmatpush.msra.mxu0 %v1881
        %2003 = vmatmul.f32.gmra.mxu0 %v1888
        %v2004 = vpop.f32.mrf.mxu0
        %v2005 = vadd.f32 0.0, %v2004
        %2006 = vmatmul.f32.gmra.mxu0 %v1891
        %v2007 = vpop.f32.mrf.mxu0
        %v2008 = vadd.f32 0.0, %v2007
        %2009 = vmatmul.f32.gmra.mxu0 %v1894
        %v2010 = vpop.f32.mrf.mxu0
        %v2011 = vadd.f32 0.0, %v2010
        %2012 = vmatmul.f32.gmra.mxu0 %v1897
        %v2013 = vpop.f32.mrf.mxu0
        %v2014 = vadd.f32 0.0, %v2013
        %2015 = vmatmul.f32.gmra.mxu0 %v1900
        %v2016 = vpop.f32.mrf.mxu0
        %v2017 = vadd.f32 0.0, %v2016
        %2018 = vmatmul.f32.gmra.mxu0 %v1903
        %v2019 = vpop.f32.mrf.mxu0
        %v2020 = vadd.f32 0.0, %v2019
        %2021 = vmatmul.f32.gmra.mxu0 %v1906
        %v2022 = vpop.f32.mrf.mxu0
        %v2023 = vadd.f32 0.0, %v2022
        %2024 = vmatmul.f32.gmra.mxu0 %v1909
        %v2025 = vpop.f32.mrf.mxu0
        %v2026 = vadd.f32 0.0, %v2025
        %2027 = vmatmul.f32.gmra.mxu0 %v1912
        %v2028 = vpop.f32.mrf.mxu0
        %v2029 = vadd.f32 0.0, %v2028
        %2030 = vmatmul.f32.gmra.mxu0 %v1915
        %v2031 = vpop.f32.mrf.mxu0
        %v2032 = vadd.f32 0.0, %v2031
        %2033 = vmatmul.f32.gmra.mxu0 %v1918
        %v2034 = vpop.f32.mrf.mxu0
        %v2035 = vadd.f32 0.0, %v2034
        %2036 = vmatmul.f32.gmra.mxu0 %v1921
        %v2037 = vpop.f32.mrf.mxu0
        %v2038 = vadd.f32 0.0, %v2037
        %2039 = vmatmul.f32.gmra.mxu0 %v1924
        %v2040 = vpop.f32.mrf.mxu0
        %v2041 = vadd.f32 0.0, %v2040
        %2042 = vmatmul.f32.gmra.mxu0 %v1927
        %v2043 = vpop.f32.mrf.mxu0
        %v2044 = vadd.f32 0.0, %v2043
        %2045 = vmatmul.f32.gmra.mxu0 %v1930
        %v2046 = vpop.f32.mrf.mxu0
        %v2047 = vadd.f32 0.0, %v2046
        %2048 = vmatmul.f32.gmra.mxu0 %v1933
        %v2049 = vpop.f32.mrf.mxu0
        %v2050 = vadd.f32 0.0, %v2049
        %2051 = vmatmul.f32.gmra.mxu0 %v1936
        %v2052 = vpop.f32.mrf.mxu0
        %v2053 = vadd.f32 0.0, %v2052
        %2054 = vmatmul.f32.gmra.mxu0 %v1939
        %v2055 = vpop.f32.mrf.mxu0
        %v2056 = vadd.f32 0.0, %v2055
        %2057 = vmatmul.f32.gmra.mxu0 %v1942
        %v2058 = vpop.f32.mrf.mxu0
        %v2059 = vadd.f32 0.0, %v2058
        %2060 = vmatmul.f32.gmra.mxu0 %v1945
        %v2061 = vpop.f32.mrf.mxu0
        %v2062 = vadd.f32 0.0, %v2061
        %2063 = vmatmul.f32.gmra.mxu0 %v1948
        %v2064 = vpop.f32.mrf.mxu0
        %v2065 = vadd.f32 0.0, %v2064
        %2066 = vmatmul.f32.gmra.mxu0 %v1951
        %v2067 = vpop.f32.mrf.mxu0
        %v2068 = vadd.f32 0.0, %v2067
        %2069 = vmatmul.f32.gmra.mxu0 %v1954
        %v2070 = vpop.f32.mrf.mxu0
        %v2071 = vadd.f32 0.0, %v2070
        %2072 = vmatmul.f32.gmra.mxu0 %v1957
        %v2073 = vpop.f32.mrf.mxu0
        %v2074 = vadd.f32 0.0, %v2073
        %2075 = vmatmul.f32.gmra.mxu0 %v1960
        %v2076 = vpop.f32.mrf.mxu0
        %v2077 = vadd.f32 0.0, %v2076
        %2078 = vmatmul.f32.gmra.mxu0 %v1963
        %v2079 = vpop.f32.mrf.mxu0
        %v2080 = vadd.f32 0.0, %v2079
        %2081 = vmatmul.f32.gmra.mxu0 %v1966
        %v2082 = vpop.f32.mrf.mxu0
        %v2083 = vadd.f32 0.0, %v2082
        %2084 = vmatmul.f32.gmra.mxu0 %v1969
        %v2085 = vpop.f32.mrf.mxu0
        %v2086 = vadd.f32 0.0, %v2085
        %2087 = vmatmul.f32.gmra.mxu0 %v1972
        %v2088 = vpop.f32.mrf.mxu0
        %v2089 = vadd.f32 0.0, %v2088
        %2090 = vmatmul.f32.gmra.mxu0 %v1975
        %v2091 = vpop.f32.mrf.mxu0
        %v2092 = vadd.f32 0.0, %v2091
        %2093 = vmatmul.f32.gmra.mxu0 %v1978
        %v2094 = vpop.f32.mrf.mxu0
        %v2095 = vadd.f32 0.0, %v2094
        %2096 = vmatmul.f32.gmra.mxu0 %v1981
        %v2097 = vpop.f32.mrf.mxu0
        %v2098 = vadd.f32 0.0, %v2097
        %2099 = vdwg.mxu0
        %v2100 = vld [vmem:[%s225] sm:$0x1]
        %v2101 = vperm.slane %v2100, 0
        %v2102 = vmul.f32 %v2005, %v2101
        %v2103 = vmul.f32 %v2008, %v2101
        %v2104 = vmul.f32 %v2011, %v2101
        %v2105 = vmul.f32 %v2014, %v2101
        %v2106 = vmul.f32 %v2017, %v2101
        %v2107 = vmul.f32 %v2020, %v2101
        %v2108 = vmul.f32 %v2023, %v2101
        %v2109 = vmul.f32 %v2026, %v2101
        %v2110 = vmul.f32 %v2029, %v2101
        %v2111 = vmul.f32 %v2032, %v2101
        %v2112 = vmul.f32 %v2035, %v2101
        %v2113 = vmul.f32 %v2038, %v2101
        %v2114 = vmul.f32 %v2041, %v2101
        %v2115 = vmul.f32 %v2044, %v2101
        %v2116 = vmul.f32 %v2047, %v2101
        %v2117 = vmul.f32 %v2050, %v2101
        %v2118 = vmul.f32 %v2053, %v2101
        %v2119 = vmul.f32 %v2056, %v2101
        %v2120 = vmul.f32 %v2059, %v2101
        %v2121 = vmul.f32 %v2062, %v2101
        %v2122 = vmul.f32 %v2065, %v2101
        %v2123 = vmul.f32 %v2068, %v2101
        %v2124 = vmul.f32 %v2071, %v2101
        %v2125 = vmul.f32 %v2074, %v2101
        %v2126 = vmul.f32 %v2077, %v2101
        %v2127 = vmul.f32 %v2080, %v2101
        %v2128 = vmul.f32 %v2083, %v2101
        %v2129 = vmul.f32 %v2086, %v2101
        %v2130 = vmul.f32 %v2089, %v2101
        %v2131 = vmul.f32 %v2092, %v2101
        %v2132 = vmul.f32 %v2095, %v2101
        %v2133 = vmul.f32 %v2098, %v2101
        %v2134 = vld [vmem:[%s225 + $0x1] sm:$0x1]
        %v2135 = vperm.slane %v2134, 0
        %v2136 = vadd.f32 %v2102, %v2135
        %v2137 = vadd.f32 %v2103, %v2135
        %v2138 = vadd.f32 %v2104, %v2135
        %v2139 = vadd.f32 %v2105, %v2135
        %v2140 = vadd.f32 %v2106, %v2135
        %v2141 = vadd.f32 %v2107, %v2135
        %v2142 = vadd.f32 %v2108, %v2135
        %v2143 = vadd.f32 %v2109, %v2135
        %v2144 = vadd.f32 %v2110, %v2135
        %v2145 = vadd.f32 %v2111, %v2135
        %v2146 = vadd.f32 %v2112, %v2135
        %v2147 = vadd.f32 %v2113, %v2135
        %v2148 = vadd.f32 %v2114, %v2135
        %v2149 = vadd.f32 %v2115, %v2135
        %v2150 = vadd.f32 %v2116, %v2135
        %v2151 = vadd.f32 %v2117, %v2135
        %v2152 = vadd.f32 %v2118, %v2135
        %v2153 = vadd.f32 %v2119, %v2135
        %v2154 = vadd.f32 %v2120, %v2135
        %v2155 = vadd.f32 %v2121, %v2135
        %v2156 = vadd.f32 %v2122, %v2135
        %v2157 = vadd.f32 %v2123, %v2135
        %v2158 = vadd.f32 %v2124, %v2135
        %v2159 = vadd.f32 %v2125, %v2135
        %v2160 = vadd.f32 %v2126, %v2135
        %v2161 = vadd.f32 %v2127, %v2135
        %v2162 = vadd.f32 %v2128, %v2135
        %v2163 = vadd.f32 %v2129, %v2135
        %v2164 = vadd.f32 %v2130, %v2135
        %v2165 = vadd.f32 %v2131, %v2135
        %v2166 = vadd.f32 %v2132, %v2135
        %v2167 = vadd.f32 %v2133, %v2135
        %v2168 = vmax.f32 %v2136, 0.0
        %v2169 = vmax.f32 %v2137, 0.0
        %v2170 = vmax.f32 %v2138, 0.0
        %v2171 = vmax.f32 %v2139, 0.0
        %v2172 = vmax.f32 %v2140, 0.0
        %v2173 = vmax.f32 %v2141, 0.0
        %v2174 = vmax.f32 %v2142, 0.0
        %v2175 = vmax.f32 %v2143, 0.0
        %v2176 = vmax.f32 %v2144, 0.0
        %v2177 = vmax.f32 %v2145, 0.0
        %v2178 = vmax.f32 %v2146, 0.0
        %v2179 = vmax.f32 %v2147, 0.0
        %v2180 = vmax.f32 %v2148, 0.0
        %v2181 = vmax.f32 %v2149, 0.0
        %v2182 = vmax.f32 %v2150, 0.0
        %v2183 = vmax.f32 %v2151, 0.0
        %v2184 = vmax.f32 %v2152, 0.0
        %v2185 = vmax.f32 %v2153, 0.0
        %v2186 = vmax.f32 %v2154, 0.0
        %v2187 = vmax.f32 %v2155, 0.0
        %v2188 = vmax.f32 %v2156, 0.0
        %v2189 = vmax.f32 %v2157, 0.0
        %v2190 = vmax.f32 %v2158, 0.0
        %v2191 = vmax.f32 %v2159, 0.0
        %v2192 = vmax.f32 %v2160, 0.0
        %v2193 = vmax.f32 %v2161, 0.0
        %v2194 = vmax.f32 %v2162, 0.0
        %v2195 = vmax.f32 %v2163, 0.0
        %v2196 = vmax.f32 %v2164, 0.0
        %v2197 = vmax.f32 %v2165, 0.0
        %v2198 = vmax.f32 %v2166, 0.0
        %v2199 = vmax.f32 %v2167, 0.0
        %2200 = vst [vmem:[%s212] sm:$0xff] %v2168
        %2201 = vst [vmem:[%s212 + $0x8] sm:$0xff] %v2169
        %2202 = vst [vmem:[%s212 + $0x10] sm:$0xff] %v2170
        %2203 = vst [vmem:[%s212 + $0x18] sm:$0xff] %v2171
        %2204 = vst [vmem:[%s212 + $0x20] sm:$0xff] %v2172
        %2205 = vst [vmem:[%s212 + $0x28] sm:$0xff] %v2173
        %2206 = vst [vmem:[%s212 + $0x30] sm:$0xff] %v2174
        %2207 = vst [vmem:[%s212 + $0x38] sm:$0xff] %v2175
        %2208 = vst [vmem:[%s212 + $0x40] sm:$0xff] %v2176
        %2209 = vst [vmem:[%s212 + $0x48] sm:$0xff] %v2177
        %2210 = vst [vmem:[%s212 + $0x50] sm:$0xff] %v2178
        %2211 = vst [vmem:[%s212 + $0x58] sm:$0xff] %v2179
        %2212 = vst [vmem:[%s212 + $0x60] sm:$0xff] %v2180
        %2213 = vst [vmem:[%s212 + $0x68] sm:$0xff] %v2181
        %2214 = vst [vmem:[%s212 + $0x70] sm:$0xff] %v2182
        %2215 = vst [vmem:[%s212 + $0x78] sm:$0xff] %v2183
        %2216 = vst [vmem:[%s212 + $0x80] sm:$0xff] %v2184
        %2217 = vst [vmem:[%s212 + $0x88] sm:$0xff] %v2185
        %2218 = vst [vmem:[%s212 + $0x90] sm:$0xff] %v2186
        %2219 = vst [vmem:[%s212 + $0x98] sm:$0xff] %v2187
        %2220 = vst [vmem:[%s212 + $0xa0] sm:$0xff] %v2188
        %2221 = vst [vmem:[%s212 + $0xa8] sm:$0xff] %v2189
        %2222 = vst [vmem:[%s212 + $0xb0] sm:$0xff] %v2190
        %2223 = vst [vmem:[%s212 + $0xb8] sm:$0xff] %v2191
        %2224 = vst [vmem:[%s212 + $0xc0] sm:$0xff] %v2192
        %2225 = vst [vmem:[%s212 + $0xc8] sm:$0xff] %v2193
        %2226 = vst [vmem:[%s212 + $0xd0] sm:$0xff] %v2194
        %2227 = vst [vmem:[%s212 + $0xd8] sm:$0xff] %v2195
        %2228 = vst [vmem:[%s212 + $0xe0] sm:$0xff] %v2196
        %2229 = vst [vmem:[%s212 + $0xe8] sm:$0xff] %v2197
        %2230 = vst [vmem:[%s212 + $0xf0] sm:$0xff] %v2198
        %2231 = vst [vmem:[%s212 + $0xf8] sm:$0xff] %v2199
        %s2232 = sand.u32 %s126, 1
        %s2233 = scalar_lea.sflag [#allocation4], %s2232
        %s2234 = sand.u32 %s126, 1
        %s2235 = smul.addr %s2234, 256
        %s2236 = scalar_lea.vmem [#allocation3], %s2235
        // Predicated region
        $region37: #{tpu_custom_call.1} parent=31 // pred_check
          %p2237 = pneg %p136
        $region38: #{tpu_custom_call.1} parent=31 // pred_check_branch
          %2239 = sbr.rel (%p2237) target = $region40
        $region39: #{tpu_custom_call.1} parent=31 // pred_region
          %s2240 = smul.u32 32, %s23
          %2242 = vsyncadd %s2233, 0
          %s2243 = sadd.s32 %s24, %s2240
          %s2244 = smul.addr %s22, 32
          %s2245 = sadd.s32 %s2243, %s2244
          %s2246 = smul.addr %s2245, 8
          %s2247 = scalar_lea.hbm %s3, %s2246
          %s2248 = sshll.u32 %s2236, 4
          %s2249 = int_to_ptr.vmem [resolvable:$true] %s2248
          %s2250 = sshll.u32 %s2247, 4
          %s2251 = int_to_ptr.hbm [resolvable:$true] %s2250
          %2256 = dma.vmem_to_hbm [thread:$0]  %s2249, 4096, %s2251, %s2233, 128, 128, 8
        $region40: #{tpu_custom_call.1} parent=31 // pred_fallthru
          _
      $region32: #{tpu_custom_call.1} parent=5 // pred_fallthru
        _
      %p2257 = scmp.le.s32.totalorder 2, %s12
      // Predicated region
      $region41: #{tpu_custom_call.1} parent=5 // pred_check
        %p2258 = pneg %p2257
      $region42: #{tpu_custom_call.1} parent=5 // pred_check_branch
        %2260 = sbr.rel (%p2258) target = $region44
      $region43: #{tpu_custom_call.1} parent=5 // pred_region
        %s2261 = ssub.s32 %s12, 2
        // Predicated region
        $region45: #{tpu_custom_call.1} parent=43 // pred_check
          %p2262 = pneg %p142
        $region46: #{tpu_custom_call.1} parent=43 // pred_check_branch
          %2264 = sbr.rel (%p2262) target = $region48
        $region47: #{tpu_custom_call.1} parent=43 // pred_region
          %s2265 = sand.u32 %s127, 1
          %s2266 = scalar_lea.sflag [#allocation4], %s2265
          %s2267 = sand.u32 %s127, 1
          %s2268 = smul.addr %s2267, 256
          %s2269 = scalar_lea.vmem [#allocation3], %s2268
          %2271 = dma.done %s2266, 4096
        $region48: #{tpu_custom_call.1} parent=43 // pred_fallthru
          _
      $region44: #{tpu_custom_call.1} parent=5 // pred_fallthru
        _
    $region6: #{tpu_custom_call.1} parent=1 // loop_footer
      %s16 = sadd.s32 1, %s12
    $region7: #{tpu_custom_call.1} parent=1 // loop_footer_branch
      %11 = sbr.rel target = $region3
    $region8: #{tpu_custom_call.1} parent=1 // loop_exit
      _
    %2272 = vsyncpa [#allocation4], 1
    %s2273 = scalar_lea.sflag [#allocation4], 1
    %2274 = vsyncpa %s2273, 1

</llo_original>
